<compile_context>
chip_gen: v7x
topology: tpu7x:2x2x1
jax: 0.10.0
libtpu: 0.0.40
codegen_flags: <defaults>
</compile_context>

<pallas_src>
import functools

import jax
import jax.numpy as jnp
from jax.experimental import pallas as pl
from jax.experimental.pallas import tpu as pltpu

# ------------------------- constants (module defaults) -------------------------
_EPS = 1e-3                      # distance_eps / loss eps
_COEFF = 0.42 * 0.2 * 332.0      # DSSP electrostatic coefficient
_LENGTH_NH = 1.015
_CUTOFF_ENERGY = -0.5
_CUTOFF_DISTANCE = 3.6
_CUTOFF_GAP = 3.0
_CUTOFF_LOCAL = 8.0


# ------------------------------ JAX glue helpers ------------------------------
def collect_neighbors(x, edge_idx):
    """x: (B, N, C), edge_idx: (B, N, K) -> (B, N, K, C)."""
    return jax.vmap(lambda xb, eb: xb[eb])(x, edge_idx)


def protein_graph(X, C, num_neighbors):
    """Masked kNN graph over Calpha distances.

    # TODO(synk): chroma's ProteinGraph builder is not provided; re-implemented
    # here as masked kNN over Calpha-Calpha distances (same output contract:
    # edge_idx (B,N,K) int, mask_ij (B,N,K) float).
    """
    B, N = C.shape
    Ca = X[:, :, 1, :]
    D = jnp.sqrt(jnp.sum((Ca[:, :, None, :] - Ca[:, None, :, :]) ** 2, -1) + _EPS)
    node_mask = (C > 0).astype(jnp.float32)
    mask2d = node_mask[:, :, None] * node_mask[:, None, :]
    D_masked = jnp.where(mask2d > 0, D, 1e9)
    k = min(num_neighbors, N)
    _, edge_idx = jax.lax.top_k(-D_masked, k)
    mask_ij = jnp.take_along_axis(mask2d, edge_idx, axis=2)
    return edge_idx, mask_ij


def _prep_structure(X, edge_idx):
    """Per-structure kernel inputs, lane-dense layout.

    Returns:
      n, ca, cp : (B, 3, N) float32
      d_o, d_c  : (B, 3, K, N) bfloat16  -- N_i-centered deltas (O_j - N_i),
                  (C_j - N_i); centering keeps the bf16 quantization error on
                  the ~3.6 A / -0.5 kcal cutoff decisions negligible.
    """
    X_prev = jnp.concatenate([X[:, :1], X[:, :-1]], axis=1)   # replicate-pad + shift
    N_i = X[:, :, 0, :]
    Ca = X[:, :, 1, :]
    Cp = X_prev[:, :, 2, :]
    O = X[:, :, 3, :]
    Cc = X[:, :, 2, :]
    Oj = collect_neighbors(O, edge_idx)    # (B, N, K, 3)
    Cj = collect_neighbors(Cc, edge_idx)   # (B, N, K, 3)
    d_o = (Oj - N_i[:, :, None, :]).astype(jnp.bfloat16)
    d_c = (Cj - N_i[:, :, None, :]).astype(jnp.bfloat16)
    t3 = lambda a: jnp.transpose(a, (0, 2, 1)).astype(jnp.float32)   # (B,3,N)
    t4 = lambda a: jnp.transpose(a, (0, 3, 2, 1))                    # (B,3,K,N), keep dtype
    return t3(N_i), t3(Ca), t3(Cp), t4(d_o), t4(d_c)


def _round_up(x, m):
    return ((x + m - 1) // m) * m


def _pad_to(a, shape):
    widths = [(0, t - s) for s, t in zip(a.shape, shape)]
    if all(w == (0, 0) for w in widths):
        return a
    return jnp.pad(a, widths)


def _choose_tiling(B, Kp, Np):
    """Generation-aware (Bt, Nt, vmem_limit): batch elements and lane chunk per
    grid step, sized against the per-TC VMEM of the current chip."""
    try:
        vmem = int(getattr(pltpu.get_tpu_info(), "vmem_capacity_bytes", 64 << 20))
    except Exception:  # conservative fallback
        vmem = 64 << 20
    if vmem >= (96 << 20):           # v5e / v6e: 128 MiB VMEM
        tile_budget = 16 << 20
        vmem_limit = 64 << 20
        max_lanes = 4096
    else:                            # v7x-class: 64 MiB per TensorCore
        tile_budget = 8 << 20
        vmem_limit = 32 << 20
        max_lanes = 1024             # smaller chunks -> parallel steps for 2 TCs

    def per_elem_bytes(nt):
        node_in = 6 * 3 * nt * 4                      # n/ca/cp (both structures), f32
        edge_in = 4 * 3 * Kp * nt * 2                 # bf16 centered deltas
        plane_in = 2 * 2 * Kp * nt + 4 * Kp * nt      # mask_pre/same bf16 + dij f32
        temps = 60 * Kp * nt                          # in-kernel f32 working planes
        return 2 * (node_in + edge_in + plane_in) + temps   # 2x: double-buffered inputs

    # Lane-chunk size: largest multiple of 128 that divides Np, fits the budget,
    # and stays under max_lanes.
    units = Np // 128
    nt = 128
    for d in range(1, units + 1):
        if units % d:
            continue
        cand = d * 128
        if cand <= max_lanes and per_elem_bytes(cand) <= tile_budget:
            nt = cand
    n_chunks = Np // nt

    # Batch elements per step within the same budget (amortizes ~0.35us/step).
    bt = 1
    for cand in range(1, min(B, 8) + 1):
        if cand * per_elem_bytes(nt) <= tile_budget:
            bt = cand
    # Keep >= 2 grid steps when possible so both TensorCores get work.
    while bt > 1 and n_chunks * ((B + bt - 1) // bt) < 2:
        bt -= 1
    return bt, nt, vmem_limit


# --------------------------------- Pallas kernel --------------------------------
def _hb_loss_kernel(n_c, ca_c, cp_c, do_c, dc_c,
                    n_t, ca_t, cp_t, do_t, dc_t,
                    m_pre, dij, same, out_ref):
    f32 = jnp.float32
    m_pre_v = m_pre[...].astype(f32)     # (Bt, Kp, Nt), exact 0/1
    same_v = same[...].astype(f32)       # (Bt, Kp, Nt), exact 0/1
    dij_v = dij[...]                     # (Bt, Kp, Nt), f32
    cut_d2 = _CUTOFF_DISTANCE * _CUTOFF_DISTANCE

    def hbonds_of(n, ca, cp, d_o, d_c):
        # n/ca/cp: (Bt,3,Nt) f32; d_o/d_c: (Bt,3,Kp,Nt) bf16 deltas (X_j - N_i).
        def normed(v):
            return v * jax.lax.rsqrt(jnp.sum(v * v, axis=1, keepdims=True) + _EPS)

        u_nh = normed(normed(n - cp) + normed(n - ca))        # (Bt,3,Nt)
        hvec = (_LENGTH_NH * u_nh)[:, :, None, :]             # H_i - N_i, (Bt,3,1,Nt)
        d_o = d_o.astype(f32)
        d_c = d_c.astype(f32)

        def d2(v):                                            # -> (Bt,Kp,Nt)
            return jnp.sum(v * v, axis=1) + _EPS

        d2_no = d2(d_o)
        U = _COEFF * (jax.lax.rsqrt(d2_no) - jax.lax.rsqrt(d2(d_c))
                      + jax.lax.rsqrt(d2(d_c - hvec)) - jax.lax.rsqrt(d2(d_o - hvec)))
        # D_no < 3.6  <=>  D_no^2 (eps included) < 3.6^2  -- no sqrt needed.
        return jnp.where((d2_no < cut_d2) & (U < _CUTOFF_ENERGY), m_pre_v, 0.0)

    hb_c = hbonds_of(n_c[...], ca_c[...], cp_c[...], do_c[...], dc_c[...])
    hb_t = hbonds_of(n_t[...], ca_t[...], cp_t[...], do_t[...], dc_t[...])

    def s(x):                             # (Bt, Kp, Nt) -> (Bt, 1, 1, 1)
        return jnp.sum(x, axis=(1, 2))[:, None, None, None]

    m_local = jnp.where(dij_v < _CUTOFF_LOCAL, same_v, 0.0)
    hb_ct = hb_c * hb_t
    same_t = same_v * hb_t
    same_c = same_v * hb_c
    parts = (
        s(hb_ct),               # 0: sum hb_c * hb_t
        s(hb_t),                # 1: sum hb_t
        s(m_local * hb_ct),     # 2: sum hb_c * hb_t_local
        s(m_local * hb_t),      # 3: sum hb_t_local
        s(same_t * dij_v),      # 4: CO_target numerator
        s(same_t),              # 5: CO_target mask sum
        s(same_c * dij_v),      # 6: CO_current numerator
        s(same_c),              # 7: CO_current mask sum
    )
    # Lane-dense store of the 8 partials (lanes 0..7, replicated across sublanes).
    lane = jax.lax.broadcasted_iota(jnp.int32, out_ref.shape, 3)
    out = jnp.zeros(out_ref.shape, f32)
    for i, p in enumerate(parts):
        out = jnp.where(lane == i, p, out)
    out_ref[...] = out


# ----------------------------------- wrapper ------------------------------------
@functools.partial(jax.jit, static_argnames=("num_neighbors",))
def loss_backbone_hbonds(X, X_target, C, num_neighbors=24):
    """Returns (recovery_local, recovery_nonlocal, error_co), each shape (B,)."""
    f32 = jnp.float32
    B, N = C.shape
    edge_idx, mask_ij = protein_graph(X_target, C, num_neighbors)
    K = edge_idx.shape[-1]

    cur = _prep_structure(X, edge_idx)          # n, ca, cp (B,3,N) f32; deltas (B,3,K,N) bf16
    tgt = _prep_structure(X_target, edge_idx)

    ix = jnp.arange(N, dtype=edge_idx.dtype)[None, :, None]
    dij = jnp.abs(edge_idx - ix).astype(f32)                             # (B,N,K)
    C_j = collect_neighbors(C[..., None], edge_idx)[..., 0]              # (B,N,K)
    same_chain = (C[:, :, None] == C_j).astype(f32)
    mask_nonlocal = 1.0 - (dij < _CUTOFF_GAP).astype(f32) * same_chain
    # NOTE: reference's F.pad(C,[1,0])[:,1:] is an identity -> mask_i == (C > 0).
    mask_internal = (C > 0).astype(f32)[:, :, None] * (C_j > 0).astype(f32)
    mask_pre = mask_ij.astype(f32) * mask_nonlocal * mask_internal       # (B,N,K), 0/1

    # Lane-dense (B, K, N) layout for the per-edge planes; 0/1 planes in bf16.
    tKN = lambda a: jnp.transpose(a, (0, 2, 1))
    mask_pre_kn = tKN(mask_pre).astype(jnp.bfloat16)
    same_kn = tKN(same_chain).astype(jnp.bfloat16)
    dij_kn = tKN(dij)                                                    # f32, exact

    Np = _round_up(N, 128)
    Kp = _round_up(K, 16)            # multiple of 16 -> native bf16 (16,128) tiles
    Bt, Nt, vmem_limit = _choose_tiling(B, Kp, Np)
    Bp = _round_up(B, Bt)            # padded batch rows have zero masks
    n_chunks = Np // Nt

    pad3 = lambda a: _pad_to(a, (Bp, 3, Np))
    pad4 = lambda a: _pad_to(a, (Bp, 3, Kp, Np))
    padkn = lambda a: _pad_to(a, (Bp, Kp, Np))
    cur = tuple(pad3(a) if a.ndim == 3 else pad4(a) for a in cur)
    tgt = tuple(pad3(a) if a.ndim == 3 else pad4(a) for a in tgt)
    mask_pre_kn = padkn(mask_pre_kn)   # zero-padded -> padding never contributes
    dij_kn = padkn(dij_kn)
    same_kn = padkn(same_kn)

    spec3 = pl.BlockSpec((Bt, 3, Nt), lambda b, n: (b, 0, n))
    spec4 = pl.BlockSpec((Bt, 3, Kp, Nt), lambda b, n: (b, 0, 0, n))
    spec_kn = pl.BlockSpec((Bt, Kp, Nt), lambda b, n: (b, 0, n))
    out_spec = pl.BlockSpec((Bt, 1, 8, 128), lambda b, n: (b, n, 0, 0))

    out = pl.pallas_call(
        _hb_loss_kernel,
        out_shape=jax.ShapeDtypeStruct((Bp, n_chunks, 8, 128), f32),
        grid=(Bp // Bt, n_chunks),
        in_specs=[spec3, spec3, spec3, spec4, spec4,     # current structure
                  spec3, spec3, spec3, spec4, spec4,     # target structure
                  spec_kn, spec_kn, spec_kn],            # mask_pre, dij, same_chain
        out_specs=out_spec,
        compiler_params=pltpu.CompilerParams(
            dimension_semantics=("parallel", "parallel"),
            vmem_limit_bytes=vmem_limit),
    )(*cur, *tgt, mask_pre_kn, dij_kn, same_kn)

    # Finish the ratios outside the kernel from the 8 partial sums per batch.
    P = jnp.sum(out[:B, :, 0, :8], axis=1)          # (B, 8)
    nk_eps = _EPS * float(N * K)                    # reference: (mask + eps).sum over N*K
    rec_loc = P[:, 2] / (P[:, 3] + _EPS)
    rec_nl = (P[:, 0] - P[:, 2]) / ((P[:, 1] - P[:, 3]) + _EPS)
    co_t = P[:, 4] / (P[:, 5] + nk_eps)
    co_c = P[:, 6] / (P[:, 7] + nk_eps)
    err_co = jnp.abs(co_t - co_c)
    return rec_loc, rec_nl, err_co


# ------------------------------------ test --------------------------------------
if __name__ == "__main__":
    key = jax.random.PRNGKey(0)
    B, N, K_NEIGHBORS = 2, 16, 8

    k1, k2, k3 = jax.random.split(key, 3)
    # Loose random-walk "backbone" so neighbor distances have some structure.
    base = jnp.cumsum(jax.random.normal(k1, (B, N, 1, 3)) * 1.5, axis=1)
    X_target = (base + 0.8 * jax.random.normal(k2, (B, N, 4, 3))).astype(jnp.float32)
    X = (X_target + 0.1 * jax.random.normal(k3, (B, N, 4, 3))).astype(jnp.float32)
    # Two chains per structure, all residues valid (chain ids > 0).
    C = jnp.concatenate(
        [jnp.full((B, N // 2), 1, jnp.int32), jnp.full((B, N - N // 2), 2, jnp.int32)],
        axis=1)

    rec_loc, rec_nl, err_co = loss_backbone_hbonds(X, X_target, C, num_neighbors=K_NEIGHBORS)
    jax.block_until_ready((rec_loc, rec_nl, err_co))
    assert rec_loc.shape == (B,) and rec_nl.shape == (B,) and err_co.shape == (B,)
    assert bool(jnp.all(jnp.isfinite(rec_loc))) and bool(jnp.all(jnp.isfinite(rec_nl)))
    assert bool(jnp.all(jnp.isfinite(err_co)))
    print("KERNEL_OK")
</pallas_src>

<mosaic_0001>
module attributes {stable_mosaic.version = 11 : i64} {
  func.func @_hb_loss_kernel(%arg0: i32, %arg1: i32, %arg2: memref<1x3x128xf32, #tpu.memory_space<vmem>>, %arg3: memref<1x3x128xf32, #tpu.memory_space<vmem>>, %arg4: memref<1x3x128xf32, #tpu.memory_space<vmem>>, %arg5: memref<1x3x16x128xbf16, #tpu.memory_space<vmem>>, %arg6: memref<1x3x16x128xbf16, #tpu.memory_space<vmem>>, %arg7: memref<1x3x128xf32, #tpu.memory_space<vmem>>, %arg8: memref<1x3x128xf32, #tpu.memory_space<vmem>>, %arg9: memref<1x3x128xf32, #tpu.memory_space<vmem>>, %arg10: memref<1x3x16x128xbf16, #tpu.memory_space<vmem>>, %arg11: memref<1x3x16x128xbf16, #tpu.memory_space<vmem>>, %arg12: memref<1x16x128xbf16, #tpu.memory_space<vmem>>, %arg13: memref<1x16x128xf32, #tpu.memory_space<vmem>>, %arg14: memref<1x16x128xbf16, #tpu.memory_space<vmem>>, %arg15: memref<1x1x8x128xf32, #tpu.memory_space<vmem>>) attributes {dimension_semantics = [#tpu.dimension_semantics<parallel>, #tpu.dimension_semantics<parallel>], iteration_bounds = array<i64: 2, 1>, scalar_prefetch = 0 : i64, scratch_operands = 0 : i64, tpu.core_type = #tpu.core_type<tc>, window_params = [{transform_indices = @transform_0, window_bounds = array<i64: 1, 3, 128>}, {transform_indices = @transform_1, window_bounds = array<i64: 1, 3, 128>}, {transform_indices = @transform_2, window_bounds = array<i64: 1, 3, 128>}, {transform_indices = @transform_3, window_bounds = array<i64: 1, 3, 16, 128>}, {transform_indices = @transform_4, window_bounds = array<i64: 1, 3, 16, 128>}, {transform_indices = @transform_5, window_bounds = array<i64: 1, 3, 128>}, {transform_indices = @transform_6, window_bounds = array<i64: 1, 3, 128>}, {transform_indices = @transform_7, window_bounds = array<i64: 1, 3, 128>}, {transform_indices = @transform_8, window_bounds = array<i64: 1, 3, 16, 128>}, {transform_indices = @transform_9, window_bounds = array<i64: 1, 3, 16, 128>}, {transform_indices = @transform_10, window_bounds = array<i64: 1, 16, 128>}, {transform_indices = @transform_11, window_bounds = array<i64: 1, 16, 128>}, {transform_indices = @transform_12, window_bounds = array<i64: 1, 16, 128>}, {transform_indices = @transform_13, window_bounds = array<i64: 1, 1, 8, 128>}]} {
    %c0 = arith.constant 0 : index
    %c0_0 = arith.constant 0 : index
    %c0_1 = arith.constant 0 : index
    %0 = vector.load %arg12[%c0, %c0_0, %c0_1] : memref<1x16x128xbf16, #tpu.memory_space<vmem>>, vector<1x16x128xbf16>
    %1 = arith.extf %0 : vector<1x16x128xbf16> to vector<1x16x128xf32>
    %c0_2 = arith.constant 0 : index
    %c0_3 = arith.constant 0 : index
    %c0_4 = arith.constant 0 : index
    %2 = vector.load %arg14[%c0_2, %c0_3, %c0_4] : memref<1x16x128xbf16, #tpu.memory_space<vmem>>, vector<1x16x128xbf16>
    %3 = arith.extf %2 : vector<1x16x128xbf16> to vector<1x16x128xf32>
    %c0_5 = arith.constant 0 : index
    %c0_6 = arith.constant 0 : index
    %c0_7 = arith.constant 0 : index
    %4 = vector.load %arg13[%c0_5, %c0_6, %c0_7] : memref<1x16x128xf32, #tpu.memory_space<vmem>>, vector<1x16x128xf32>
    %c0_8 = arith.constant 0 : index
    %c0_9 = arith.constant 0 : index
    %c0_10 = arith.constant 0 : index
    %5 = vector.load %arg2[%c0_8, %c0_9, %c0_10] : memref<1x3x128xf32, #tpu.memory_space<vmem>>, vector<1x3x128xf32>
    %c0_11 = arith.constant 0 : index
    %c0_12 = arith.constant 0 : index
    %c0_13 = arith.constant 0 : index
    %6 = vector.load %arg3[%c0_11, %c0_12, %c0_13] : memref<1x3x128xf32, #tpu.memory_space<vmem>>, vector<1x3x128xf32>
    %c0_14 = arith.constant 0 : index
    %c0_15 = arith.constant 0 : index
    %c0_16 = arith.constant 0 : index
    %7 = vector.load %arg4[%c0_14, %c0_15, %c0_16] : memref<1x3x128xf32, #tpu.memory_space<vmem>>, vector<1x3x128xf32>
    %c0_17 = arith.constant 0 : index
    %c0_18 = arith.constant 0 : index
    %c0_19 = arith.constant 0 : index
    %c0_20 = arith.constant 0 : index
    %8 = vector.load %arg5[%c0_17, %c0_18, %c0_19, %c0_20] : memref<1x3x16x128xbf16, #tpu.memory_space<vmem>>, vector<1x3x16x128xbf16>
    %c0_21 = arith.constant 0 : index
    %c0_22 = arith.constant 0 : index
    %c0_23 = arith.constant 0 : index
    %c0_24 = arith.constant 0 : index
    %9 = vector.load %arg6[%c0_21, %c0_22, %c0_23, %c0_24] : memref<1x3x16x128xbf16, #tpu.memory_space<vmem>>, vector<1x3x16x128xbf16>
    %10 = arith.subf %5, %7 : vector<1x3x128xf32>
    %11 = arith.mulf %10, %10 : vector<1x3x128xf32>
    %cst = arith.constant dense<0.000000e+00> : vector<1x128xf32>
    %12 = vector.multi_reduction <add>, %11, %cst [1] : vector<1x3x128xf32> to vector<1x128xf32>
    %13 = vector.shape_cast %12 : vector<1x128xf32> to vector<1x1x128xf32>
    %cst_25 = arith.constant 1.000000e-03 : f32
    %14 = vector.broadcast %cst_25 : f32 to vector<1x1x128xf32>
    %15 = arith.addf %13, %14 : vector<1x1x128xf32>
    %16 = math.rsqrt %15 : vector<1x1x128xf32>
    %17 = vector.broadcast %16 : vector<1x1x128xf32> to vector<1x3x128xf32>
    %18 = arith.mulf %10, %17 : vector<1x3x128xf32>
    %19 = arith.subf %5, %6 : vector<1x3x128xf32>
    %20 = arith.mulf %19, %19 : vector<1x3x128xf32>
    %cst_26 = arith.constant dense<0.000000e+00> : vector<1x128xf32>
    %21 = vector.multi_reduction <add>, %20, %cst_26 [1] : vector<1x3x128xf32> to vector<1x128xf32>
    %22 = vector.shape_cast %21 : vector<1x128xf32> to vector<1x1x128xf32>
    %cst_27 = arith.constant 1.000000e-03 : f32
    %23 = vector.broadcast %cst_27 : f32 to vector<1x1x128xf32>
    %24 = arith.addf %22, %23 : vector<1x1x128xf32>
    %25 = math.rsqrt %24 : vector<1x1x128xf32>
    %26 = vector.broadcast %25 : vector<1x1x128xf32> to vector<1x3x128xf32>
    %27 = arith.mulf %19, %26 : vector<1x3x128xf32>
    %28 = arith.addf %18, %27 : vector<1x3x128xf32>
    %29 = arith.mulf %28, %28 : vector<1x3x128xf32>
    %cst_28 = arith.constant dense<0.000000e+00> : vector<1x128xf32>
    %30 = vector.multi_reduction <add>, %29, %cst_28 [1] : vector<1x3x128xf32> to vector<1x128xf32>
    %31 = vector.shape_cast %30 : vector<1x128xf32> to vector<1x1x128xf32>
    %cst_29 = arith.constant 1.000000e-03 : f32
    %32 = vector.broadcast %cst_29 : f32 to vector<1x1x128xf32>
    %33 = arith.addf %31, %32 : vector<1x1x128xf32>
    %34 = math.rsqrt %33 : vector<1x1x128xf32>
    %35 = vector.broadcast %34 : vector<1x1x128xf32> to vector<1x3x128xf32>
    %36 = arith.mulf %28, %35 : vector<1x3x128xf32>
    %cst_30 = arith.constant 1.015000e+00 : f32
    %37 = vector.broadcast %cst_30 : f32 to vector<1x3x128xf32>
    %38 = arith.mulf %37, %36 : vector<1x3x128xf32>
    %39 = vector.shape_cast %38 : vector<1x3x128xf32> to vector<1x3x1x128xf32>
    %40 = arith.extf %8 : vector<1x3x16x128xbf16> to vector<1x3x16x128xf32>
    %41 = arith.extf %9 : vector<1x3x16x128xbf16> to vector<1x3x16x128xf32>
    %42 = arith.mulf %40, %40 : vector<1x3x16x128xf32>
    %cst_31 = arith.constant dense<0.000000e+00> : vector<1x16x128xf32>
    %43 = vector.multi_reduction <add>, %42, %cst_31 [1] : vector<1x3x16x128xf32> to vector<1x16x128xf32>
    %cst_32 = arith.constant 1.000000e-03 : f32
    %44 = vector.broadcast %cst_32 : f32 to vector<1x16x128xf32>
    %45 = arith.addf %43, %44 : vector<1x16x128xf32>
    %46 = math.rsqrt %45 : vector<1x16x128xf32>
    %47 = arith.mulf %41, %41 : vector<1x3x16x128xf32>
    %cst_33 = arith.constant dense<0.000000e+00> : vector<1x16x128xf32>
    %48 = vector.multi_reduction <add>, %47, %cst_33 [1] : vector<1x3x16x128xf32> to vector<1x16x128xf32>
    %cst_34 = arith.constant 1.000000e-03 : f32
    %49 = vector.broadcast %cst_34 : f32 to vector<1x16x128xf32>
    %50 = arith.addf %48, %49 : vector<1x16x128xf32>
    %51 = math.rsqrt %50 : vector<1x16x128xf32>
    %52 = arith.subf %46, %51 : vector<1x16x128xf32>
    %53 = vector.broadcast %39 : vector<1x3x1x128xf32> to vector<1x3x16x128xf32>
    %54 = arith.subf %41, %53 : vector<1x3x16x128xf32>
    %55 = arith.mulf %54, %54 : vector<1x3x16x128xf32>
    %cst_35 = arith.constant dense<0.000000e+00> : vector<1x16x128xf32>
    %56 = vector.multi_reduction <add>, %55, %cst_35 [1] : vector<1x3x16x128xf32> to vector<1x16x128xf32>
    %cst_36 = arith.constant 1.000000e-03 : f32
    %57 = vector.broadcast %cst_36 : f32 to vector<1x16x128xf32>
    %58 = arith.addf %56, %57 : vector<1x16x128xf32>
    %59 = math.rsqrt %58 : vector<1x16x128xf32>
    %60 = arith.addf %52, %59 : vector<1x16x128xf32>
    %61 = vector.broadcast %39 : vector<1x3x1x128xf32> to vector<1x3x16x128xf32>
    %62 = arith.subf %40, %61 : vector<1x3x16x128xf32>
    %63 = arith.mulf %62, %62 : vector<1x3x16x128xf32>
    %cst_37 = arith.constant dense<0.000000e+00> : vector<1x16x128xf32>
    %64 = vector.multi_reduction <add>, %63, %cst_37 [1] : vector<1x3x16x128xf32> to vector<1x16x128xf32>
    %cst_38 = arith.constant 1.000000e-03 : f32
    %65 = vector.broadcast %cst_38 : f32 to vector<1x16x128xf32>
    %66 = arith.addf %64, %65 : vector<1x16x128xf32>
    %67 = math.rsqrt %66 : vector<1x16x128xf32>
    %68 = arith.subf %60, %67 : vector<1x16x128xf32>
    %cst_39 = arith.constant 2.788800e+01 : f32
    %69 = vector.broadcast %cst_39 : f32 to vector<1x16x128xf32>
    %70 = arith.mulf %69, %68 : vector<1x16x128xf32>
    %cst_40 = arith.constant 1.296000e+01 : f32
    %71 = vector.broadcast %cst_40 : f32 to vector<1x16x128xf32>
    %72 = arith.cmpf olt, %45, %71 : vector<1x16x128xf32>
    %cst_41 = arith.constant -5.000000e-01 : f32
    %73 = vector.broadcast %cst_41 : f32 to vector<1x16x128xf32>
    %74 = arith.cmpf olt, %70, %73 : vector<1x16x128xf32>
    %75 = arith.andi %72, %74 : vector<1x16x128xi1>
    %cst_42 = arith.constant 0.000000e+00 : f32
    %76 = vector.broadcast %cst_42 : f32 to vector<1x16x128xf32>
    %77 = arith.select %75, %1, %76 : vector<1x16x128xi1>, vector<1x16x128xf32>
    %c0_43 = arith.constant 0 : index
    %c0_44 = arith.constant 0 : index
    %c0_45 = arith.constant 0 : index
    %78 = vector.load %arg7[%c0_43, %c0_44, %c0_45] : memref<1x3x128xf32, #tpu.memory_space<vmem>>, vector<1x3x128xf32>
    %c0_46 = arith.constant 0 : index
    %c0_47 = arith.constant 0 : index
    %c0_48 = arith.constant 0 : index
    %79 = vector.load %arg8[%c0_46, %c0_47, %c0_48] : memref<1x3x128xf32, #tpu.memory_space<vmem>>, vector<1x3x128xf32>
    %c0_49 = arith.constant 0 : index
    %c0_50 = arith.constant 0 : index
    %c0_51 = arith.constant 0 : index
    %80 = vector.load %arg9[%c0_49, %c0_50, %c0_51] : memref<1x3x128xf32, #tpu.memory_space<vmem>>, vector<1x3x128xf32>
    %c0_52 = arith.constant 0 : index
    %c0_53 = arith.constant 0 : index
    %c0_54 = arith.constant 0 : index
    %c0_55 = arith.constant 0 : index
    %81 = vector.load %arg10[%c0_52, %c0_53, %c0_54, %c0_55] : memref<1x3x16x128xbf16, #tpu.memory_space<vmem>>, vector<1x3x16x128xbf16>
    %c0_56 = arith.constant 0 : index
    %c0_57 = arith.constant 0 : index
    %c0_58 = arith.constant 0 : index
    %c0_59 = arith.constant 0 : index
    %82 = vector.load %arg11[%c0_56, %c0_57, %c0_58, %c0_59] : memref<1x3x16x128xbf16, #tpu.memory_space<vmem>>, vector<1x3x16x128xbf16>
    %83 = arith.subf %78, %80 : vector<1x3x128xf32>
    %84 = arith.mulf %83, %83 : vector<1x3x128xf32>
    %cst_60 = arith.constant dense<0.000000e+00> : vector<1x128xf32>
    %85 = vector.multi_reduction <add>, %84, %cst_60 [1] : vector<1x3x128xf32> to vector<1x128xf32>
    %86 = vector.shape_cast %85 : vector<1x128xf32> to vector<1x1x128xf32>
    %cst_61 = arith.constant 1.000000e-03 : f32
    %87 = vector.broadcast %cst_61 : f32 to vector<1x1x128xf32>
    %88 = arith.addf %86, %87 : vector<1x1x128xf32>
    %89 = math.rsqrt %88 : vector<1x1x128xf32>
    %90 = vector.broadcast %89 : vector<1x1x128xf32> to vector<1x3x128xf32>
    %91 = arith.mulf %83, %90 : vector<1x3x128xf32>
    %92 = arith.subf %78, %79 : vector<1x3x128xf32>
    %93 = arith.mulf %92, %92 : vector<1x3x128xf32>
    %cst_62 = arith.constant dense<0.000000e+00> : vector<1x128xf32>
    %94 = vector.multi_reduction <add>, %93, %cst_62 [1] : vector<1x3x128xf32> to vector<1x128xf32>
    %95 = vector.shape_cast %94 : vector<1x128xf32> to vector<1x1x128xf32>
    %cst_63 = arith.constant 1.000000e-03 : f32
    %96 = vector.broadcast %cst_63 : f32 to vector<1x1x128xf32>
    %97 = arith.addf %95, %96 : vector<1x1x128xf32>
    %98 = math.rsqrt %97 : vector<1x1x128xf32>
    %99 = vector.broadcast %98 : vector<1x1x128xf32> to vector<1x3x128xf32>
    %100 = arith.mulf %92, %99 : vector<1x3x128xf32>
    %101 = arith.addf %91, %100 : vector<1x3x128xf32>
    %102 = arith.mulf %101, %101 : vector<1x3x128xf32>
    %cst_64 = arith.constant dense<0.000000e+00> : vector<1x128xf32>
    %103 = vector.multi_reduction <add>, %102, %cst_64 [1] : vector<1x3x128xf32> to vector<1x128xf32>
    %104 = vector.shape_cast %103 : vector<1x128xf32> to vector<1x1x128xf32>
    %cst_65 = arith.constant 1.000000e-03 : f32
    %105 = vector.broadcast %cst_65 : f32 to vector<1x1x128xf32>
    %106 = arith.addf %104, %105 : vector<1x1x128xf32>
    %107 = math.rsqrt %106 : vector<1x1x128xf32>
    %108 = vector.broadcast %107 : vector<1x1x128xf32> to vector<1x3x128xf32>
    %109 = arith.mulf %101, %108 : vector<1x3x128xf32>
    %cst_66 = arith.constant 1.015000e+00 : f32
    %110 = vector.broadcast %cst_66 : f32 to vector<1x3x128xf32>
    %111 = arith.mulf %110, %109 : vector<1x3x128xf32>
    %112 = vector.shape_cast %111 : vector<1x3x128xf32> to vector<1x3x1x128xf32>
    %113 = arith.extf %81 : vector<1x3x16x128xbf16> to vector<1x3x16x128xf32>
    %114 = arith.extf %82 : vector<1x3x16x128xbf16> to vector<1x3x16x128xf32>
    %115 = arith.mulf %113, %113 : vector<1x3x16x128xf32>
    %cst_67 = arith.constant dense<0.000000e+00> : vector<1x16x128xf32>
    %116 = vector.multi_reduction <add>, %115, %cst_67 [1] : vector<1x3x16x128xf32> to vector<1x16x128xf32>
    %cst_68 = arith.constant 1.000000e-03 : f32
    %117 = vector.broadcast %cst_68 : f32 to vector<1x16x128xf32>
    %118 = arith.addf %116, %117 : vector<1x16x128xf32>
    %119 = math.rsqrt %118 : vector<1x16x128xf32>
    %120 = arith.mulf %114, %114 : vector<1x3x16x128xf32>
    %cst_69 = arith.constant dense<0.000000e+00> : vector<1x16x128xf32>
    %121 = vector.multi_reduction <add>, %120, %cst_69 [1] : vector<1x3x16x128xf32> to vector<1x16x128xf32>
    %cst_70 = arith.constant 1.000000e-03 : f32
    %122 = vector.broadcast %cst_70 : f32 to vector<1x16x128xf32>
    %123 = arith.addf %121, %122 : vector<1x16x128xf32>
    %124 = math.rsqrt %123 : vector<1x16x128xf32>
    %125 = arith.subf %119, %124 : vector<1x16x128xf32>
    %126 = vector.broadcast %112 : vector<1x3x1x128xf32> to vector<1x3x16x128xf32>
    %127 = arith.subf %114, %126 : vector<1x3x16x128xf32>
    %128 = arith.mulf %127, %127 : vector<1x3x16x128xf32>
    %cst_71 = arith.constant dense<0.000000e+00> : vector<1x16x128xf32>
    %129 = vector.multi_reduction <add>, %128, %cst_71 [1] : vector<1x3x16x128xf32> to vector<1x16x128xf32>
    %cst_72 = arith.constant 1.000000e-03 : f32
    %130 = vector.broadcast %cst_72 : f32 to vector<1x16x128xf32>
    %131 = arith.addf %129, %130 : vector<1x16x128xf32>
    %132 = math.rsqrt %131 : vector<1x16x128xf32>
    %133 = arith.addf %125, %132 : vector<1x16x128xf32>
    %134 = vector.broadcast %112 : vector<1x3x1x128xf32> to vector<1x3x16x128xf32>
    %135 = arith.subf %113, %134 : vector<1x3x16x128xf32>
    %136 = arith.mulf %135, %135 : vector<1x3x16x128xf32>
    %cst_73 = arith.constant dense<0.000000e+00> : vector<1x16x128xf32>
    %137 = vector.multi_reduction <add>, %136, %cst_73 [1] : vector<1x3x16x128xf32> to vector<1x16x128xf32>
    %cst_74 = arith.constant 1.000000e-03 : f32
    %138 = vector.broadcast %cst_74 : f32 to vector<1x16x128xf32>
    %139 = arith.addf %137, %138 : vector<1x16x128xf32>
    %140 = math.rsqrt %139 : vector<1x16x128xf32>
    %141 = arith.subf %133, %140 : vector<1x16x128xf32>
    %cst_75 = arith.constant 2.788800e+01 : f32
    %142 = vector.broadcast %cst_75 : f32 to vector<1x16x128xf32>
    %143 = arith.mulf %142, %141 : vector<1x16x128xf32>
    %cst_76 = arith.constant 1.296000e+01 : f32
    %144 = vector.broadcast %cst_76 : f32 to vector<1x16x128xf32>
    %145 = arith.cmpf olt, %118, %144 : vector<1x16x128xf32>
    %cst_77 = arith.constant -5.000000e-01 : f32
    %146 = vector.broadcast %cst_77 : f32 to vector<1x16x128xf32>
    %147 = arith.cmpf olt, %143, %146 : vector<1x16x128xf32>
    %148 = arith.andi %145, %147 : vector<1x16x128xi1>
    %cst_78 = arith.constant 0.000000e+00 : f32
    %149 = vector.broadcast %cst_78 : f32 to vector<1x16x128xf32>
    %150 = arith.select %148, %1, %149 : vector<1x16x128xi1>, vector<1x16x128xf32>
    %cst_79 = arith.constant 8.000000e+00 : f32
    %151 = vector.broadcast %cst_79 : f32 to vector<1x16x128xf32>
    %152 = arith.cmpf olt, %4, %151 : vector<1x16x128xf32>
    %cst_80 = arith.constant 0.000000e+00 : f32
    %153 = vector.broadcast %cst_80 : f32 to vector<1x16x128xf32>
    %154 = arith.select %152, %3, %153 : vector<1x16x128xi1>, vector<1x16x128xf32>
    %155 = arith.mulf %77, %150 : vector<1x16x128xf32>
    %156 = arith.mulf %3, %150 : vector<1x16x128xf32>
    %157 = arith.mulf %3, %77 : vector<1x16x128xf32>
    %cst_81 = arith.constant dense<0.000000e+00> : vector<1xf32>
    %158 = vector.multi_reduction <add>, %155, %cst_81 [1, 2] : vector<1x16x128xf32> to vector<1xf32>
    %159 = vector.shape_cast %158 : vector<1xf32> to vector<1x1x1x1xf32>
    %cst_82 = arith.constant dense<0.000000e+00> : vector<1xf32>
    %160 = vector.multi_reduction <add>, %150, %cst_82 [1, 2] : vector<1x16x128xf32> to vector<1xf32>
    %161 = vector.shape_cast %160 : vector<1xf32> to vector<1x1x1x1xf32>
    %162 = arith.mulf %154, %155 : vector<1x16x128xf32>
    %cst_83 = arith.constant dense<0.000000e+00> : vector<1xf32>
    %163 = vector.multi_reduction <add>, %162, %cst_83 [1, 2] : vector<1x16x128xf32> to vector<1xf32>
    %164 = vector.shape_cast %163 : vector<1xf32> to vector<1x1x1x1xf32>
    %165 = arith.mulf %154, %150 : vector<1x16x128xf32>
    %cst_84 = arith.constant dense<0.000000e+00> : vector<1xf32>
    %166 = vector.multi_reduction <add>, %165, %cst_84 [1, 2] : vector<1x16x128xf32> to vector<1xf32>
    %167 = vector.shape_cast %166 : vector<1xf32> to vector<1x1x1x1xf32>
    %168 = arith.mulf %156, %4 : vector<1x16x128xf32>
    %cst_85 = arith.constant dense<0.000000e+00> : vector<1xf32>
    %169 = vector.multi_reduction <add>, %168, %cst_85 [1, 2] : vector<1x16x128xf32> to vector<1xf32>
    %170 = vector.shape_cast %169 : vector<1xf32> to vector<1x1x1x1xf32>
    %cst_86 = arith.constant dense<0.000000e+00> : vector<1xf32>
    %171 = vector.multi_reduction <add>, %156, %cst_86 [1, 2] : vector<1x16x128xf32> to vector<1xf32>
    %172 = vector.shape_cast %171 : vector<1xf32> to vector<1x1x1x1xf32>
    %173 = arith.mulf %157, %4 : vector<1x16x128xf32>
    %cst_87 = arith.constant dense<0.000000e+00> : vector<1xf32>
    %174 = vector.multi_reduction <add>, %173, %cst_87 [1, 2] : vector<1x16x128xf32> to vector<1xf32>
    %175 = vector.shape_cast %174 : vector<1xf32> to vector<1x1x1x1xf32>
    %cst_88 = arith.constant dense<0.000000e+00> : vector<1xf32>
    %176 = vector.multi_reduction <add>, %157, %cst_88 [1, 2] : vector<1x16x128xf32> to vector<1xf32>
    %177 = vector.shape_cast %176 : vector<1xf32> to vector<1x1x1x1xf32>
    %178 = tpu.iota {dimensions = array<i32: 3>} : vector<1x1x8x128xi32>
    %cst_89 = arith.constant 0.000000e+00 : f32
    %179 = vector.broadcast %cst_89 : f32 to vector<1x1x8x128xf32>
    %c0_i32 = arith.constant 0 : i32
    %180 = vector.broadcast %c0_i32 : i32 to vector<1x1x8x128xi32>
    %181 = arith.cmpi eq, %178, %180 : vector<1x1x8x128xi32>
    %182 = vector.shape_cast %159 : vector<1x1x1x1xf32> to vector<1x1x1x1xf32>
    %183 = vector.broadcast %182 : vector<1x1x1x1xf32> to vector<1x1x8x128xf32>
    %184 = arith.select %181, %183, %179 : vector<1x1x8x128xi1>, vector<1x1x8x128xf32>
    %c1_i32 = arith.constant 1 : i32
    %185 = vector.broadcast %c1_i32 : i32 to vector<1x1x8x128xi32>
    %186 = arith.cmpi eq, %178, %185 : vector<1x1x8x128xi32>
    %187 = vector.shape_cast %161 : vector<1x1x1x1xf32> to vector<1x1x1x1xf32>
    %188 = vector.broadcast %187 : vector<1x1x1x1xf32> to vector<1x1x8x128xf32>
    %189 = arith.select %186, %188, %184 : vector<1x1x8x128xi1>, vector<1x1x8x128xf32>
    %c2_i32 = arith.constant 2 : i32
    %190 = vector.broadcast %c2_i32 : i32 to vector<1x1x8x128xi32>
    %191 = arith.cmpi eq, %178, %190 : vector<1x1x8x128xi32>
    %192 = vector.shape_cast %164 : vector<1x1x1x1xf32> to vector<1x1x1x1xf32>
    %193 = vector.broadcast %192 : vector<1x1x1x1xf32> to vector<1x1x8x128xf32>
    %194 = arith.select %191, %193, %189 : vector<1x1x8x128xi1>, vector<1x1x8x128xf32>
    %c3_i32 = arith.constant 3 : i32
    %195 = vector.broadcast %c3_i32 : i32 to vector<1x1x8x128xi32>
    %196 = arith.cmpi eq, %178, %195 : vector<1x1x8x128xi32>
    %197 = vector.shape_cast %167 : vector<1x1x1x1xf32> to vector<1x1x1x1xf32>
    %198 = vector.broadcast %197 : vector<1x1x1x1xf32> to vector<1x1x8x128xf32>
    %199 = arith.select %196, %198, %194 : vector<1x1x8x128xi1>, vector<1x1x8x128xf32>
    %c4_i32 = arith.constant 4 : i32
    %200 = vector.broadcast %c4_i32 : i32 to vector<1x1x8x128xi32>
    %201 = arith.cmpi eq, %178, %200 : vector<1x1x8x128xi32>
    %202 = vector.shape_cast %170 : vector<1x1x1x1xf32> to vector<1x1x1x1xf32>
    %203 = vector.broadcast %202 : vector<1x1x1x1xf32> to vector<1x1x8x128xf32>
    %204 = arith.select %201, %203, %199 : vector<1x1x8x128xi1>, vector<1x1x8x128xf32>
    %c5_i32 = arith.constant 5 : i32
    %205 = vector.broadcast %c5_i32 : i32 to vector<1x1x8x128xi32>
    %206 = arith.cmpi eq, %178, %205 : vector<1x1x8x128xi32>
    %207 = vector.shape_cast %172 : vector<1x1x1x1xf32> to vector<1x1x1x1xf32>
    %208 = vector.broadcast %207 : vector<1x1x1x1xf32> to vector<1x1x8x128xf32>
    %209 = arith.select %206, %208, %204 : vector<1x1x8x128xi1>, vector<1x1x8x128xf32>
    %c6_i32 = arith.constant 6 : i32
    %210 = vector.broadcast %c6_i32 : i32 to vector<1x1x8x128xi32>
    %211 = arith.cmpi eq, %178, %210 : vector<1x1x8x128xi32>
    %212 = vector.shape_cast %175 : vector<1x1x1x1xf32> to vector<1x1x1x1xf32>
    %213 = vector.broadcast %212 : vector<1x1x1x1xf32> to vector<1x1x8x128xf32>
    %214 = arith.select %211, %213, %209 : vector<1x1x8x128xi1>, vector<1x1x8x128xf32>
    %c7_i32 = arith.constant 7 : i32
    %215 = vector.broadcast %c7_i32 : i32 to vector<1x1x8x128xi32>
    %216 = arith.cmpi eq, %178, %215 : vector<1x1x8x128xi32>
    %217 = vector.shape_cast %177 : vector<1x1x1x1xf32> to vector<1x1x1x1xf32>
    %218 = vector.broadcast %217 : vector<1x1x1x1xf32> to vector<1x1x8x128xf32>
    %219 = arith.select %216, %218, %214 : vector<1x1x8x128xi1>, vector<1x1x8x128xf32>
    %c0_90 = arith.constant 0 : index
    %c0_91 = arith.constant 0 : index
    %c0_92 = arith.constant 0 : index
    %c0_93 = arith.constant 0 : index
    %220 = vector.load %arg15[%c0_90, %c0_91, %c0_92, %c0_93] : memref<1x1x8x128xf32, #tpu.memory_space<vmem>>, vector<1x1x8x128xf32>
    tpu.vector_store %arg15[%c0_90, %c0_91, %c0_92, %c0_93], %219 {strides = array<i32>} : memref<1x1x8x128xf32, #tpu.memory_space<vmem>>, vector<1x1x8x128xf32>,
    return
  }
  func.func @transform_0(%arg0: i32, %arg1: i32) -> (i32, i32, i32) {
    %c0_i32 = arith.constant 0 : i32
    %c0_i32_0 = arith.constant 0 : i32
    return %arg0, %c0_i32, %arg1 : i32, i32, i32
  }
  func.func @transform_1(%arg0: i32, %arg1: i32) -> (i32, i32, i32) {
    %c0_i32 = arith.constant 0 : i32
    %c0_i32_0 = arith.constant 0 : i32
    return %arg0, %c0_i32, %arg1 : i32, i32, i32
  }
  func.func @transform_2(%arg0: i32, %arg1: i32) -> (i32, i32, i32) {
    %c0_i32 = arith.constant 0 : i32
    %c0_i32_0 = arith.constant 0 : i32
    return %arg0, %c0_i32, %arg1 : i32, i32, i32
  }
  func.func @transform_3(%arg0: i32, %arg1: i32) -> (i32, i32, i32, i32) {
    %c0_i32 = arith.constant 0 : i32
    %c0_i32_0 = arith.constant 0 : i32
    %c0_i32_1 = arith.constant 0 : i32
    return %arg0, %c0_i32, %c0_i32_0, %arg1 : i32, i32, i32, i32
  }
  func.func @transform_4(%arg0: i32, %arg1: i32) -> (i32, i32, i32, i32) {
    %c0_i32 = arith.constant 0 : i32
    %c0_i32_0 = arith.constant 0 : i32
    %c0_i32_1 = arith.constant 0 : i32
    return %arg0, %c0_i32, %c0_i32_0, %arg1 : i32, i32, i32, i32
  }
  func.func @transform_5(%arg0: i32, %arg1: i32) -> (i32, i32, i32) {
    %c0_i32 = arith.constant 0 : i32
    %c0_i32_0 = arith.constant 0 : i32
    return %arg0, %c0_i32, %arg1 : i32, i32, i32
  }
  func.func @transform_6(%arg0: i32, %arg1: i32) -> (i32, i32, i32) {
    %c0_i32 = arith.constant 0 : i32
    %c0_i32_0 = arith.constant 0 : i32
    return %arg0, %c0_i32, %arg1 : i32, i32, i32
  }
  func.func @transform_7(%arg0: i32, %arg1: i32) -> (i32, i32, i32) {
    %c0_i32 = arith.constant 0 : i32
    %c0_i32_0 = arith.constant 0 : i32
    return %arg0, %c0_i32, %arg1 : i32, i32, i32
  }
  func.func @transform_8(%arg0: i32, %arg1: i32) -> (i32, i32, i32, i32) {
    %c0_i32 = arith.constant 0 : i32
    %c0_i32_0 = arith.constant 0 : i32
    %c0_i32_1 = arith.constant 0 : i32
    return %arg0, %c0_i32, %c0_i32_0, %arg1 : i32, i32, i32, i32
  }
  func.func @transform_9(%arg0: i32, %arg1: i32) -> (i32, i32, i32, i32) {
    %c0_i32 = arith.constant 0 : i32
    %c0_i32_0 = arith.constant 0 : i32
    %c0_i32_1 = arith.constant 0 : i32
    return %arg0, %c0_i32, %c0_i32_0, %arg1 : i32, i32, i32, i32
  }
  func.func @transform_10(%arg0: i32, %arg1: i32) -> (i32, i32, i32) {
    %c0_i32 = arith.constant 0 : i32
    %c0_i32_0 = arith.constant 0 : i32
    return %arg0, %c0_i32, %arg1 : i32, i32, i32
  }
  func.func @transform_11(%arg0: i32, %arg1: i32) -> (i32, i32, i32) {
    %c0_i32 = arith.constant 0 : i32
    %c0_i32_0 = arith.constant 0 : i32
    return %arg0, %c0_i32, %arg1 : i32, i32, i32
  }
  func.func @transform_12(%arg0: i32, %arg1: i32) -> (i32, i32, i32) {
    %c0_i32 = arith.constant 0 : i32
    %c0_i32_0 = arith.constant 0 : i32
    return %arg0, %c0_i32, %arg1 : i32, i32, i32
  }
  func.func @transform_13(%arg0: i32, %arg1: i32) -> (i32, i32, i32, i32) {
    %c0_i32 = arith.constant 0 : i32
    %c0_i32_0 = arith.constant 0 : i32
    %c0_i32_1 = arith.constant 0 : i32
    return %arg0, %arg1, %c0_i32, %c0_i32_0 : i32, i32, i32, i32
  }
}

</mosaic_0001>

<llo_original>
// kernel: squeeze.34
$region0: #{squeeze.34}
  %s0 = inlined_call_operand.vmem [shape: s32[256], index: 0, kind: input, shape index: {}]
  %s1 = inlined_call_operand.vmem [shape: s32[2,16,8], index: 1, kind: output, shape index: {}]
  $region1: #{squeeze.34} parent=0
    #allocation0 [shape = 'u8[4096]{0}', space=vmem, size = 0x1000, scoped, tag = 'scoped mem for input reshape']
    %s3 = sshllo.u32 0, 2
    %v4 = vld [vmem:[%s0] sm:%s3]
    %5 = vst [vmem:[#allocation0] sm:%s3] %v4
    %v6 = vld [vmem:[#allocation0] sm:$0x3]
    %vm7 = vcmask 64512
    %8 = vst.msk [vmem:[%s1] ss:$16 sm:$0x3] %vm7, %v6
    %v9 = vld [vmem:[#allocation0] sm:$0x3]
    %10 = vrot.lane.b32.xlu0 %v9, 120
    %v11 = vpop.permute.xlu0 %10
    %vm12 = vcmask 64512
    %s13 = scalar_lea.vmem %s1, 1
    %14 = vst.msk [vmem:[%s13] ss:$16 sm:$0x3] %vm12, %v11
    %v15 = vld [vmem:[#allocation0] sm:$0x3]
    %16 = vrot.lane.b32.xlu0 %v15, 112
    %v17 = vpop.permute.xlu0 %16
    %vm18 = vcmask 64512
    %s19 = scalar_lea.vmem %s1, 2
    %20 = vst.msk [vmem:[%s19] ss:$16 sm:$0x3] %vm18, %v17
    %v21 = vld [vmem:[#allocation0] sm:$0x3]
    %22 = vrot.lane.b32.xlu0 %v21, 104
    %v23 = vpop.permute.xlu0 %22
    %vm24 = vcmask 64512
    %s25 = scalar_lea.vmem %s1, 3
    %26 = vst.msk [vmem:[%s25] ss:$16 sm:$0x3] %vm24, %v23
    %v27 = vld [vmem:[#allocation0] sm:$0x3]
    %28 = vrot.lane.b32.xlu0 %v27, 96
    %v29 = vpop.permute.xlu0 %28
    %vm30 = vcmask 64512
    %s31 = scalar_lea.vmem %s1, 4
    %32 = vst.msk [vmem:[%s31] ss:$16 sm:$0x3] %vm30, %v29
    %v33 = vld [vmem:[#allocation0] sm:$0x3]
    %34 = vrot.lane.b32.xlu0 %v33, 88
    %v35 = vpop.permute.xlu0 %34
    %vm36 = vcmask 64512
    %s37 = scalar_lea.vmem %s1, 5
    %38 = vst.msk [vmem:[%s37] ss:$16 sm:$0x3] %vm36, %v35
    %v39 = vld [vmem:[#allocation0] sm:$0x3]
    %40 = vrot.lane.b32.xlu0 %v39, 80
    %v41 = vpop.permute.xlu0 %40
    %vm42 = vcmask 64512
    %s43 = scalar_lea.vmem %s1, 6
    %44 = vst.msk [vmem:[%s43] ss:$16 sm:$0x3] %vm42, %v41
    %v45 = vld [vmem:[#allocation0] sm:$0x3]
    %46 = vrot.lane.b32.xlu0 %v45, 72
    %v47 = vpop.permute.xlu0 %46
    %vm48 = vcmask 64512
    %s49 = scalar_lea.vmem %s1, 7
    %50 = vst.msk [vmem:[%s49] ss:$16 sm:$0x3] %vm48, %v47
    %v51 = vld [vmem:[#allocation0] sm:$0x3]
    %52 = vrot.lane.b32.xlu0 %v51, 64
    %v53 = vpop.permute.xlu0 %52
    %vm54 = vcmask 64512
    %s55 = scalar_lea.vmem %s1, 8
    %56 = vst.msk [vmem:[%s55] ss:$16 sm:$0x3] %vm54, %v53
    %v57 = vld [vmem:[#allocation0] sm:$0x3]
    %58 = vrot.lane.b32.xlu0 %v57, 56
    %v59 = vpop.permute.xlu0 %58
    %vm60 = vcmask 64512
    %s61 = scalar_lea.vmem %s1, 9
    %62 = vst.msk [vmem:[%s61] ss:$16 sm:$0x3] %vm60, %v59
    %v63 = vld [vmem:[#allocation0] sm:$0x3]
    %64 = vrot.lane.b32.xlu0 %v63, 48
    %v65 = vpop.permute.xlu0 %64
    %vm66 = vcmask 64512
    %s67 = scalar_lea.vmem %s1, 10
    %68 = vst.msk [vmem:[%s67] ss:$16 sm:$0x3] %vm66, %v65
    %v69 = vld [vmem:[#allocation0] sm:$0x3]
    %70 = vrot.lane.b32.xlu0 %v69, 40
    %v71 = vpop.permute.xlu0 %70
    %vm72 = vcmask 64512
    %s73 = scalar_lea.vmem %s1, 11
    %74 = vst.msk [vmem:[%s73] ss:$16 sm:$0x3] %vm72, %v71
    %v75 = vld [vmem:[#allocation0] sm:$0x3]
    %76 = vrot.lane.b32.xlu0 %v75, 32
    %v77 = vpop.permute.xlu0 %76
    %vm78 = vcmask 64512
    %s79 = scalar_lea.vmem %s1, 12
    %80 = vst.msk [vmem:[%s79] ss:$16 sm:$0x3] %vm78, %v77
    %v81 = vld [vmem:[#allocation0] sm:$0x3]
    %82 = vrot.lane.b32.xlu0 %v81, 24
    %v83 = vpop.permute.xlu0 %82
    %vm84 = vcmask 64512
    %s85 = scalar_lea.vmem %s1, 13
    %86 = vst.msk [vmem:[%s85] ss:$16 sm:$0x3] %vm84, %v83
    %v87 = vld [vmem:[#allocation0] sm:$0x3]
    %88 = vrot.lane.b32.xlu0 %v87, 16
    %v89 = vpop.permute.xlu0 %88
    %vm90 = vcmask 64512
    %s91 = scalar_lea.vmem %s1, 14
    %92 = vst.msk [vmem:[%s91] ss:$16 sm:$0x3] %vm90, %v89
    %v93 = vld [vmem:[#allocation0] sm:$0x3]
    %94 = vrot.lane.b32.xlu0 %v93, 8
    %v95 = vpop.permute.xlu0 %94
    %vm96 = vcmask 64512
    %s97 = scalar_lea.vmem %s1, 15
    %98 = vst.msk [vmem:[%s97] ss:$16 sm:$0x3] %vm96, %v95

// kernel: loss_backbone_hbonds.1
$region0: #{loss_backbone_hbonds.1}
  #allocation0 [shape = 'u32[]', space=smem, size = 0x4, offset = 0x4, fixed_abs, tag = 'smem constant byte address 0x4 - core index']
  #allocation1 [shape = 'u32[144,128]{1,0:T(1,128)}', space=vmem, size = 0x12000, scoped, tag = 'internal scratch']
  %s0 = inlined_call_operand.vmem [shape: f32[2,3,128], index: 0, kind: input, shape index: {}]
  %s1 = inlined_call_operand.vmem [shape: f32[2,3,128], index: 1, kind: input, shape index: {}]
  %s2 = inlined_call_operand.vmem [shape: f32[2,3,128], index: 2, kind: input, shape index: {}]
  %s3 = inlined_call_operand.vmem [shape: bf16[2,3,16,128], index: 3, kind: input, shape index: {}]
  %s4 = inlined_call_operand.vmem [shape: bf16[2,3,16,128], index: 4, kind: input, shape index: {}]
  %s5 = inlined_call_operand.vmem [shape: f32[2,3,128], index: 5, kind: input, shape index: {}]
  %s6 = inlined_call_operand.vmem [shape: f32[2,3,128], index: 6, kind: input, shape index: {}]
  %s7 = inlined_call_operand.vmem [shape: f32[2,3,128], index: 7, kind: input, shape index: {}]
  %s8 = inlined_call_operand.vmem [shape: bf16[2,3,16,128], index: 8, kind: input, shape index: {}]
  %s9 = inlined_call_operand.vmem [shape: bf16[2,3,16,128], index: 9, kind: input, shape index: {}]
  %s10 = inlined_call_operand.vmem [shape: bf16[2,16,128], index: 10, kind: input, shape index: {}]
  %s11 = inlined_call_operand.vmem [shape: f32[2,16,128], index: 11, kind: input, shape index: {}]
  %s12 = inlined_call_operand.vmem [shape: bf16[2,16,128], index: 12, kind: input, shape index: {}]
  %s13 = inlined_call_operand.vmem [shape: f32[2,1,8,128], index: 13, kind: output, shape index: {}]
  %s14 = sld [smem:[#allocation0]]
  $region85: #{loss_backbone_hbonds.1} parent=0
    _
  %s16 = ssub.s32 1, %s14
  %s17 = scalar_select 0, %s16, %s14
  loop: start=0, step=1, limit=4
  $region2: #{loss_backbone_hbonds.1} parent=0 // loop_pre_header
    _
  $region3: #{loss_backbone_hbonds.1} parent=0 // loop_header
    %s19 = sphi 0, %s23
    %p20 = scmp.ge.s32.totalorder %s19, 4
    %s26 = sphi 0, %s38
    %s27 = sphi 0, %s34
    %s28 = sphi 0, %s26
    %s29 = sphi 0, %s27
    %s30 = sphi 0, %s28
    %s31 = sphi 0, %s29
    %s43 = sphi 0, %s45
    %s46 = sphi 0, %s43
    %s47 = sphi 0, %s46
    %s63 = sphi 0, %s47
    %s71 = sphi 0, %s73
    %s74 = sphi 0, %s71
    %s75 = sphi 0, %s74
    %s91 = sphi 0, %s75
    %s99 = sphi 0, %s101
    %s102 = sphi 0, %s99
    %s103 = sphi 0, %s102
    %s119 = sphi 0, %s103
    %s127 = sphi 0, %s129
    %s130 = sphi 0, %s127
    %s131 = sphi 0, %s130
    %s147 = sphi 0, %s131
    %s155 = sphi 0, %s157
    %s158 = sphi 0, %s155
    %s159 = sphi 0, %s158
    %s175 = sphi 0, %s159
    %s183 = sphi 0, %s185
    %s186 = sphi 0, %s183
    %s187 = sphi 0, %s186
    %s203 = sphi 0, %s187
    %s211 = sphi 0, %s213
    %s214 = sphi 0, %s211
    %s215 = sphi 0, %s214
    %s231 = sphi 0, %s215
    %s239 = sphi 0, %s241
    %s242 = sphi 0, %s239
    %s243 = sphi 0, %s242
    %s259 = sphi 0, %s243
    %s267 = sphi 0, %s269
    %s270 = sphi 0, %s267
    %s271 = sphi 0, %s270
    %s287 = sphi 0, %s271
    %s295 = sphi 0, %s297
    %s298 = sphi 0, %s295
    %s299 = sphi 0, %s298
    %s315 = sphi 0, %s299
    %s323 = sphi 0, %s325
    %s326 = sphi 0, %s323
    %s327 = sphi 0, %s326
    %s343 = sphi 0, %s327
    %s351 = sphi 0, %s353
    %s354 = sphi 0, %s351
    %s355 = sphi 0, %s354
    %s371 = sphi 0, %s355
    %s379 = sphi 0, %s381
    %s382 = sphi 0, %s379
    %s383 = sphi 0, %s382
    %s399 = sphi 0, %s383
    %s407 = sphi 0, %s409
    %s410 = sphi 0, %s407
    %s411 = sphi 0, %s410
    %s427 = sphi 0, %s411
  $region4: #{loss_backbone_hbonds.1} parent=0 // loop_header_branch
    %22 = sbr.rel (%p20) target = $region8
  $region5: #{loss_backbone_hbonds.1} parent=0 // loop_body
    %s24 = ssub.s32 %s19, 1
    %s25 = ssub.s32 %s19, 2
    %s32 = sadd.s32 1, %s27
    %p33 = scmp.ge.s32.totalorder %s32, 1
    %s34 = scalar_select %p33, 0, %s32
    %s35 = sadd.s32 1, %s26
    %s36 = scalar_select %p33, %s35, %s26
    %p37 = scmp.ge.s32.totalorder %s36, 2
    %s38 = scalar_select %p37, 0, %s36
    %s39 = ssub.s32 %s26, %s38
    %s40 = ssub.s32 %s27, %s34
    %s41 = sor.u32 %s39, %s40
    %p42 = scmp.eq.s32.totalorder %s41, 0
    %s44 = sadd.s32 %s43, 1
    %s45 = scalar_select %p42, %s43, %s44
    %p48 = pneg %p42
    %p49 = scmp.eq.s32.totalorder %s19, 1
    %p50 = por %p48, %p49
    %p51 = scmp.ne.s32.totalorder %s43, %s46
    %p52 = scmp.eq.s32.totalorder %s19, 0
    %p53 = por %p51, %p52
    %p54 = scmp.ne.s32.totalorder %s43, %s46
    %p55 = scmp.eq.s32.totalorder %s24, 1
    %p56 = por %p54, %p55
    %p57 = scmp.ne.s32.totalorder %s46, %s47
    %p58 = scmp.eq.s32.totalorder %s24, 0
    %p59 = por %p57, %p58
    %p60 = scmp.ne.s32.totalorder %s46, %s47
    %p61 = scmp.eq.s32.totalorder %s25, 1
    %p62 = por %p60, %p61
    %p64 = scmp.ne.s32.totalorder %s47, %s63
    %p65 = scmp.eq.s32.totalorder %s25, 0
    %p66 = por %p64, %p65
    %s67 = ssub.s32 %s26, %s38
    %s68 = ssub.s32 %s27, %s34
    %s69 = sor.u32 %s67, %s68
    %p70 = scmp.eq.s32.totalorder %s69, 0
    %s72 = sadd.s32 %s71, 1
    %s73 = scalar_select %p70, %s71, %s72
    %p76 = pneg %p70
    %p77 = scmp.eq.s32.totalorder %s19, 1
    %p78 = por %p76, %p77
    %p79 = scmp.ne.s32.totalorder %s71, %s74
    %p80 = scmp.eq.s32.totalorder %s19, 0
    %p81 = por %p79, %p80
    %p82 = scmp.ne.s32.totalorder %s71, %s74
    %p83 = scmp.eq.s32.totalorder %s24, 1
    %p84 = por %p82, %p83
    %p85 = scmp.ne.s32.totalorder %s74, %s75
    %p86 = scmp.eq.s32.totalorder %s24, 0
    %p87 = por %p85, %p86
    %p88 = scmp.ne.s32.totalorder %s74, %s75
    %p89 = scmp.eq.s32.totalorder %s25, 1
    %p90 = por %p88, %p89
    %p92 = scmp.ne.s32.totalorder %s75, %s91
    %p93 = scmp.eq.s32.totalorder %s25, 0
    %p94 = por %p92, %p93
    %s95 = ssub.s32 %s26, %s38
    %s96 = ssub.s32 %s27, %s34
    %s97 = sor.u32 %s95, %s96
    %p98 = scmp.eq.s32.totalorder %s97, 0
    %s100 = sadd.s32 %s99, 1
    %s101 = scalar_select %p98, %s99, %s100
    %p104 = pneg %p98
    %p105 = scmp.eq.s32.totalorder %s19, 1
    %p106 = por %p104, %p105
    %p107 = scmp.ne.s32.totalorder %s99, %s102
    %p108 = scmp.eq.s32.totalorder %s19, 0
    %p109 = por %p107, %p108
    %p110 = scmp.ne.s32.totalorder %s99, %s102
    %p111 = scmp.eq.s32.totalorder %s24, 1
    %p112 = por %p110, %p111
    %p113 = scmp.ne.s32.totalorder %s102, %s103
    %p114 = scmp.eq.s32.totalorder %s24, 0
    %p115 = por %p113, %p114
    %p116 = scmp.ne.s32.totalorder %s102, %s103
    %p117 = scmp.eq.s32.totalorder %s25, 1
    %p118 = por %p116, %p117
    %p120 = scmp.ne.s32.totalorder %s103, %s119
    %p121 = scmp.eq.s32.totalorder %s25, 0
    %p122 = por %p120, %p121
    %s123 = ssub.s32 %s26, %s38
    %s124 = ssub.s32 %s27, %s34
    %s125 = sor.u32 %s123, %s124
    %p126 = scmp.eq.s32.totalorder %s125, 0
    %s128 = sadd.s32 %s127, 1
    %s129 = scalar_select %p126, %s127, %s128
    %p132 = pneg %p126
    %p133 = scmp.eq.s32.totalorder %s19, 1
    %p134 = por %p132, %p133
    %p135 = scmp.ne.s32.totalorder %s127, %s130
    %p136 = scmp.eq.s32.totalorder %s19, 0
    %p137 = por %p135, %p136
    %p138 = scmp.ne.s32.totalorder %s127, %s130
    %p139 = scmp.eq.s32.totalorder %s24, 1
    %p140 = por %p138, %p139
    %p141 = scmp.ne.s32.totalorder %s130, %s131
    %p142 = scmp.eq.s32.totalorder %s24, 0
    %p143 = por %p141, %p142
    %p144 = scmp.ne.s32.totalorder %s130, %s131
    %p145 = scmp.eq.s32.totalorder %s25, 1
    %p146 = por %p144, %p145
    %p148 = scmp.ne.s32.totalorder %s131, %s147
    %p149 = scmp.eq.s32.totalorder %s25, 0
    %p150 = por %p148, %p149
    %s151 = ssub.s32 %s26, %s38
    %s152 = ssub.s32 %s27, %s34
    %s153 = sor.u32 %s151, %s152
    %p154 = scmp.eq.s32.totalorder %s153, 0
    %s156 = sadd.s32 %s155, 1
    %s157 = scalar_select %p154, %s155, %s156
    %p160 = pneg %p154
    %p161 = scmp.eq.s32.totalorder %s19, 1
    %p162 = por %p160, %p161
    %p163 = scmp.ne.s32.totalorder %s155, %s158
    %p164 = scmp.eq.s32.totalorder %s19, 0
    %p165 = por %p163, %p164
    %p166 = scmp.ne.s32.totalorder %s155, %s158
    %p167 = scmp.eq.s32.totalorder %s24, 1
    %p168 = por %p166, %p167
    %p169 = scmp.ne.s32.totalorder %s158, %s159
    %p170 = scmp.eq.s32.totalorder %s24, 0
    %p171 = por %p169, %p170
    %p172 = scmp.ne.s32.totalorder %s158, %s159
    %p173 = scmp.eq.s32.totalorder %s25, 1
    %p174 = por %p172, %p173
    %p176 = scmp.ne.s32.totalorder %s159, %s175
    %p177 = scmp.eq.s32.totalorder %s25, 0
    %p178 = por %p176, %p177
    %s179 = ssub.s32 %s26, %s38
    %s180 = ssub.s32 %s27, %s34
    %s181 = sor.u32 %s179, %s180
    %p182 = scmp.eq.s32.totalorder %s181, 0
    %s184 = sadd.s32 %s183, 1
    %s185 = scalar_select %p182, %s183, %s184
    %p188 = pneg %p182
    %p189 = scmp.eq.s32.totalorder %s19, 1
    %p190 = por %p188, %p189
    %p191 = scmp.ne.s32.totalorder %s183, %s186
    %p192 = scmp.eq.s32.totalorder %s19, 0
    %p193 = por %p191, %p192
    %p194 = scmp.ne.s32.totalorder %s183, %s186
    %p195 = scmp.eq.s32.totalorder %s24, 1
    %p196 = por %p194, %p195
    %p197 = scmp.ne.s32.totalorder %s186, %s187
    %p198 = scmp.eq.s32.totalorder %s24, 0
    %p199 = por %p197, %p198
    %p200 = scmp.ne.s32.totalorder %s186, %s187
    %p201 = scmp.eq.s32.totalorder %s25, 1
    %p202 = por %p200, %p201
    %p204 = scmp.ne.s32.totalorder %s187, %s203
    %p205 = scmp.eq.s32.totalorder %s25, 0
    %p206 = por %p204, %p205
    %s207 = ssub.s32 %s26, %s38
    %s208 = ssub.s32 %s27, %s34
    %s209 = sor.u32 %s207, %s208
    %p210 = scmp.eq.s32.totalorder %s209, 0
    %s212 = sadd.s32 %s211, 1
    %s213 = scalar_select %p210, %s211, %s212
    %p216 = pneg %p210
    %p217 = scmp.eq.s32.totalorder %s19, 1
    %p218 = por %p216, %p217
    %p219 = scmp.ne.s32.totalorder %s211, %s214
    %p220 = scmp.eq.s32.totalorder %s19, 0
    %p221 = por %p219, %p220
    %p222 = scmp.ne.s32.totalorder %s211, %s214
    %p223 = scmp.eq.s32.totalorder %s24, 1
    %p224 = por %p222, %p223
    %p225 = scmp.ne.s32.totalorder %s214, %s215
    %p226 = scmp.eq.s32.totalorder %s24, 0
    %p227 = por %p225, %p226
    %p228 = scmp.ne.s32.totalorder %s214, %s215
    %p229 = scmp.eq.s32.totalorder %s25, 1
    %p230 = por %p228, %p229
    %p232 = scmp.ne.s32.totalorder %s215, %s231
    %p233 = scmp.eq.s32.totalorder %s25, 0
    %p234 = por %p232, %p233
    %s235 = ssub.s32 %s26, %s38
    %s236 = ssub.s32 %s27, %s34
    %s237 = sor.u32 %s235, %s236
    %p238 = scmp.eq.s32.totalorder %s237, 0
    %s240 = sadd.s32 %s239, 1
    %s241 = scalar_select %p238, %s239, %s240
    %p244 = pneg %p238
    %p245 = scmp.eq.s32.totalorder %s19, 1
    %p246 = por %p244, %p245
    %p247 = scmp.ne.s32.totalorder %s239, %s242
    %p248 = scmp.eq.s32.totalorder %s19, 0
    %p249 = por %p247, %p248
    %p250 = scmp.ne.s32.totalorder %s239, %s242
    %p251 = scmp.eq.s32.totalorder %s24, 1
    %p252 = por %p250, %p251
    %p253 = scmp.ne.s32.totalorder %s242, %s243
    %p254 = scmp.eq.s32.totalorder %s24, 0
    %p255 = por %p253, %p254
    %p256 = scmp.ne.s32.totalorder %s242, %s243
    %p257 = scmp.eq.s32.totalorder %s25, 1
    %p258 = por %p256, %p257
    %p260 = scmp.ne.s32.totalorder %s243, %s259
    %p261 = scmp.eq.s32.totalorder %s25, 0
    %p262 = por %p260, %p261
    %s263 = ssub.s32 %s26, %s38
    %s264 = ssub.s32 %s27, %s34
    %s265 = sor.u32 %s263, %s264
    %p266 = scmp.eq.s32.totalorder %s265, 0
    %s268 = sadd.s32 %s267, 1
    %s269 = scalar_select %p266, %s267, %s268
    %p272 = pneg %p266
    %p273 = scmp.eq.s32.totalorder %s19, 1
    %p274 = por %p272, %p273
    %p275 = scmp.ne.s32.totalorder %s267, %s270
    %p276 = scmp.eq.s32.totalorder %s19, 0
    %p277 = por %p275, %p276
    %p278 = scmp.ne.s32.totalorder %s267, %s270
    %p279 = scmp.eq.s32.totalorder %s24, 1
    %p280 = por %p278, %p279
    %p281 = scmp.ne.s32.totalorder %s270, %s271
    %p282 = scmp.eq.s32.totalorder %s24, 0
    %p283 = por %p281, %p282
    %p284 = scmp.ne.s32.totalorder %s270, %s271
    %p285 = scmp.eq.s32.totalorder %s25, 1
    %p286 = por %p284, %p285
    %p288 = scmp.ne.s32.totalorder %s271, %s287
    %p289 = scmp.eq.s32.totalorder %s25, 0
    %p290 = por %p288, %p289
    %s291 = ssub.s32 %s26, %s38
    %s292 = ssub.s32 %s27, %s34
    %s293 = sor.u32 %s291, %s292
    %p294 = scmp.eq.s32.totalorder %s293, 0
    %s296 = sadd.s32 %s295, 1
    %s297 = scalar_select %p294, %s295, %s296
    %p300 = pneg %p294
    %p301 = scmp.eq.s32.totalorder %s19, 1
    %p302 = por %p300, %p301
    %p303 = scmp.ne.s32.totalorder %s295, %s298
    %p304 = scmp.eq.s32.totalorder %s19, 0
    %p305 = por %p303, %p304
    %p306 = scmp.ne.s32.totalorder %s295, %s298
    %p307 = scmp.eq.s32.totalorder %s24, 1
    %p308 = por %p306, %p307
    %p309 = scmp.ne.s32.totalorder %s298, %s299
    %p310 = scmp.eq.s32.totalorder %s24, 0
    %p311 = por %p309, %p310
    %p312 = scmp.ne.s32.totalorder %s298, %s299
    %p313 = scmp.eq.s32.totalorder %s25, 1
    %p314 = por %p312, %p313
    %p316 = scmp.ne.s32.totalorder %s299, %s315
    %p317 = scmp.eq.s32.totalorder %s25, 0
    %p318 = por %p316, %p317
    %s319 = ssub.s32 %s26, %s38
    %s320 = ssub.s32 %s27, %s34
    %s321 = sor.u32 %s319, %s320
    %p322 = scmp.eq.s32.totalorder %s321, 0
    %s324 = sadd.s32 %s323, 1
    %s325 = scalar_select %p322, %s323, %s324
    %p328 = pneg %p322
    %p329 = scmp.eq.s32.totalorder %s19, 1
    %p330 = por %p328, %p329
    %p331 = scmp.ne.s32.totalorder %s323, %s326
    %p332 = scmp.eq.s32.totalorder %s19, 0
    %p333 = por %p331, %p332
    %p334 = scmp.ne.s32.totalorder %s323, %s326
    %p335 = scmp.eq.s32.totalorder %s24, 1
    %p336 = por %p334, %p335
    %p337 = scmp.ne.s32.totalorder %s326, %s327
    %p338 = scmp.eq.s32.totalorder %s24, 0
    %p339 = por %p337, %p338
    %p340 = scmp.ne.s32.totalorder %s326, %s327
    %p341 = scmp.eq.s32.totalorder %s25, 1
    %p342 = por %p340, %p341
    %p344 = scmp.ne.s32.totalorder %s327, %s343
    %p345 = scmp.eq.s32.totalorder %s25, 0
    %p346 = por %p344, %p345
    %s347 = ssub.s32 %s26, %s38
    %s348 = ssub.s32 %s27, %s34
    %s349 = sor.u32 %s347, %s348
    %p350 = scmp.eq.s32.totalorder %s349, 0
    %s352 = sadd.s32 %s351, 1
    %s353 = scalar_select %p350, %s351, %s352
    %p356 = pneg %p350
    %p357 = scmp.eq.s32.totalorder %s19, 1
    %p358 = por %p356, %p357
    %p359 = scmp.ne.s32.totalorder %s351, %s354
    %p360 = scmp.eq.s32.totalorder %s19, 0
    %p361 = por %p359, %p360
    %p362 = scmp.ne.s32.totalorder %s351, %s354
    %p363 = scmp.eq.s32.totalorder %s24, 1
    %p364 = por %p362, %p363
    %p365 = scmp.ne.s32.totalorder %s354, %s355
    %p366 = scmp.eq.s32.totalorder %s24, 0
    %p367 = por %p365, %p366
    %p368 = scmp.ne.s32.totalorder %s354, %s355
    %p369 = scmp.eq.s32.totalorder %s25, 1
    %p370 = por %p368, %p369
    %p372 = scmp.ne.s32.totalorder %s355, %s371
    %p373 = scmp.eq.s32.totalorder %s25, 0
    %p374 = por %p372, %p373
    %s375 = ssub.s32 %s26, %s38
    %s376 = ssub.s32 %s27, %s34
    %s377 = sor.u32 %s375, %s376
    %p378 = scmp.eq.s32.totalorder %s377, 0
    %s380 = sadd.s32 %s379, 1
    %s381 = scalar_select %p378, %s379, %s380
    %p384 = pneg %p378
    %p385 = scmp.eq.s32.totalorder %s19, 1
    %p386 = por %p384, %p385
    %p387 = scmp.ne.s32.totalorder %s379, %s382
    %p388 = scmp.eq.s32.totalorder %s19, 0
    %p389 = por %p387, %p388
    %p390 = scmp.ne.s32.totalorder %s379, %s382
    %p391 = scmp.eq.s32.totalorder %s24, 1
    %p392 = por %p390, %p391
    %p393 = scmp.ne.s32.totalorder %s382, %s383
    %p394 = scmp.eq.s32.totalorder %s24, 0
    %p395 = por %p393, %p394
    %p396 = scmp.ne.s32.totalorder %s382, %s383
    %p397 = scmp.eq.s32.totalorder %s25, 1
    %p398 = por %p396, %p397
    %p400 = scmp.ne.s32.totalorder %s383, %s399
    %p401 = scmp.eq.s32.totalorder %s25, 0
    %p402 = por %p400, %p401
    %s403 = ssub.s32 %s26, %s38
    %s404 = ssub.s32 %s27, %s34
    %s405 = sor.u32 %s403, %s404
    %p406 = scmp.eq.s32.totalorder %s405, 0
    %s408 = sadd.s32 %s407, 1
    %s409 = scalar_select %p406, %s407, %s408
    %p412 = pneg %p406
    %p413 = scmp.eq.s32.totalorder %s19, 1
    %p414 = por %p412, %p413
    %p415 = scmp.ne.s32.totalorder %s407, %s410
    %p416 = scmp.eq.s32.totalorder %s19, 0
    %p417 = por %p415, %p416
    %p418 = scmp.ne.s32.totalorder %s407, %s410
    %p419 = scmp.eq.s32.totalorder %s24, 1
    %p420 = por %p418, %p419
    %p421 = scmp.ne.s32.totalorder %s410, %s411
    %p422 = scmp.eq.s32.totalorder %s24, 0
    %p423 = por %p421, %p422
    %p424 = scmp.ne.s32.totalorder %s410, %s411
    %p425 = scmp.eq.s32.totalorder %s25, 1
    %p426 = por %p424, %p425
    %p428 = scmp.ne.s32.totalorder %s411, %s427
    %p429 = scmp.eq.s32.totalorder %s25, 0
    %p430 = por %p428, %p429
    %p431 = scmp.le.s32.totalorder 1, %s19
    %p432 = scmp.lt.s32.totalorder %s19, 3
    %p433 = pnand %p431, %p432
    %p434 = pneg %p433
    // Predicated region
    $region9: #{loss_backbone_hbonds.1} parent=5 // pred_check
      _
    $region10: #{loss_backbone_hbonds.1} parent=5 // pred_check_branch
      %436 = sbr.rel (%p433) target = $region12
    $region11: #{loss_backbone_hbonds.1} parent=5 // pred_region
      %s437 = ssub.s32 %s19, 1
    $region12: #{loss_backbone_hbonds.1} parent=5 // pred_fallthru
      _
    %p438 = scmp.lt.s32.totalorder %s19, 2
    // Predicated region
    $region13: #{loss_backbone_hbonds.1} parent=5 // pred_check
      %p439 = pneg %p438
    $region14: #{loss_backbone_hbonds.1} parent=5 // pred_check_branch
      %441 = sbr.rel (%p439) target = $region16
    $region15: #{loss_backbone_hbonds.1} parent=5 // pred_region
      // Predicated region
      $region17: #{loss_backbone_hbonds.1} parent=15 // pred_check
        %p442 = pneg %p53
      $region18: #{loss_backbone_hbonds.1} parent=15 // pred_check_branch
        %444 = sbr.rel (%p442) target = $region20
      $region19: #{loss_backbone_hbonds.1} parent=15 // pred_region
        %p445 = scmp.lt.s32.totalorder %s26, 1
        %s446 = scalar_select %p445, %s26, 1
        %p447 = scmp.lt.s32.totalorder %s27, 0
        %s448 = scalar_select %p447, %s27, 0
        %s449 = sadd.s32 %s448, %s446
        %s450 = smul.addr %s449, 4
        %s451 = scalar_lea.vmem %s0, %s450
      $region20: #{loss_backbone_hbonds.1} parent=15 // pred_fallthru
        _
      // Predicated region
      $region21: #{loss_backbone_hbonds.1} parent=15 // pred_check
        %p452 = pneg %p81
      $region22: #{loss_backbone_hbonds.1} parent=15 // pred_check_branch
        %454 = sbr.rel (%p452) target = $region24
      $region23: #{loss_backbone_hbonds.1} parent=15 // pred_region
        %p455 = scmp.lt.s32.totalorder %s26, 1
        %s456 = scalar_select %p455, %s26, 1
        %p457 = scmp.lt.s32.totalorder %s27, 0
        %s458 = scalar_select %p457, %s27, 0
        %s459 = sadd.s32 %s458, %s456
        %s460 = smul.addr %s459, 4
        %s461 = scalar_lea.vmem %s1, %s460
      $region24: #{loss_backbone_hbonds.1} parent=15 // pred_fallthru
        _
      // Predicated region
      $region25: #{loss_backbone_hbonds.1} parent=15 // pred_check
        %p462 = pneg %p109
      $region26: #{loss_backbone_hbonds.1} parent=15 // pred_check_branch
        %464 = sbr.rel (%p462) target = $region28
      $region27: #{loss_backbone_hbonds.1} parent=15 // pred_region
        %p465 = scmp.lt.s32.totalorder %s26, 1
        %s466 = scalar_select %p465, %s26, 1
        %p467 = scmp.lt.s32.totalorder %s27, 0
        %s468 = scalar_select %p467, %s27, 0
        %s469 = sadd.s32 %s468, %s466
        %s470 = smul.addr %s469, 4
        %s471 = scalar_lea.vmem %s2, %s470
      $region28: #{loss_backbone_hbonds.1} parent=15 // pred_fallthru
        _
      // Predicated region
      $region29: #{loss_backbone_hbonds.1} parent=15 // pred_check
        %p472 = pneg %p137
      $region30: #{loss_backbone_hbonds.1} parent=15 // pred_check_branch
        %474 = sbr.rel (%p472) target = $region32
      $region31: #{loss_backbone_hbonds.1} parent=15 // pred_region
        %p475 = scmp.lt.s32.totalorder %s26, 1
        %s476 = scalar_select %p475, %s26, 1
        %p477 = scmp.lt.s32.totalorder %s27, 0
        %s478 = scalar_select %p477, %s27, 0
        %s479 = smul.addr %s476, 6
        %s480 = sadd.s32 %s478, %s479
        %s481 = smul.addr %s480, 4
        %s482 = scalar_lea.vmem %s3, %s481
      $region32: #{loss_backbone_hbonds.1} parent=15 // pred_fallthru
        _
      // Predicated region
      $region33: #{loss_backbone_hbonds.1} parent=15 // pred_check
        %p483 = pneg %p165
      $region34: #{loss_backbone_hbonds.1} parent=15 // pred_check_branch
        %485 = sbr.rel (%p483) target = $region36
      $region35: #{loss_backbone_hbonds.1} parent=15 // pred_region
        %p486 = scmp.lt.s32.totalorder %s26, 1
        %s487 = scalar_select %p486, %s26, 1
        %p488 = scmp.lt.s32.totalorder %s27, 0
        %s489 = scalar_select %p488, %s27, 0
        %s490 = smul.addr %s487, 6
        %s491 = sadd.s32 %s489, %s490
        %s492 = smul.addr %s491, 4
        %s493 = scalar_lea.vmem %s4, %s492
      $region36: #{loss_backbone_hbonds.1} parent=15 // pred_fallthru
        _
      // Predicated region
      $region37: #{loss_backbone_hbonds.1} parent=15 // pred_check
        %p494 = pneg %p193
      $region38: #{loss_backbone_hbonds.1} parent=15 // pred_check_branch
        %496 = sbr.rel (%p494) target = $region40
      $region39: #{loss_backbone_hbonds.1} parent=15 // pred_region
        %p497 = scmp.lt.s32.totalorder %s26, 1
        %s498 = scalar_select %p497, %s26, 1
        %p499 = scmp.lt.s32.totalorder %s27, 0
        %s500 = scalar_select %p499, %s27, 0
        %s501 = sadd.s32 %s500, %s498
        %s502 = smul.addr %s501, 4
        %s503 = scalar_lea.vmem %s5, %s502
      $region40: #{loss_backbone_hbonds.1} parent=15 // pred_fallthru
        _
      // Predicated region
      $region41: #{loss_backbone_hbonds.1} parent=15 // pred_check
        %p504 = pneg %p221
      $region42: #{loss_backbone_hbonds.1} parent=15 // pred_check_branch
        %506 = sbr.rel (%p504) target = $region44
      $region43: #{loss_backbone_hbonds.1} parent=15 // pred_region
        %p507 = scmp.lt.s32.totalorder %s26, 1
        %s508 = scalar_select %p507, %s26, 1
        %p509 = scmp.lt.s32.totalorder %s27, 0
        %s510 = scalar_select %p509, %s27, 0
        %s511 = sadd.s32 %s510, %s508
        %s512 = smul.addr %s511, 4
        %s513 = scalar_lea.vmem %s6, %s512
      $region44: #{loss_backbone_hbonds.1} parent=15 // pred_fallthru
        _
      // Predicated region
      $region45: #{loss_backbone_hbonds.1} parent=15 // pred_check
        %p514 = pneg %p249
      $region46: #{loss_backbone_hbonds.1} parent=15 // pred_check_branch
        %516 = sbr.rel (%p514) target = $region48
      $region47: #{loss_backbone_hbonds.1} parent=15 // pred_region
        %p517 = scmp.lt.s32.totalorder %s26, 1
        %s518 = scalar_select %p517, %s26, 1
        %p519 = scmp.lt.s32.totalorder %s27, 0
        %s520 = scalar_select %p519, %s27, 0
        %s521 = sadd.s32 %s520, %s518
        %s522 = smul.addr %s521, 4
        %s523 = scalar_lea.vmem %s7, %s522
      $region48: #{loss_backbone_hbonds.1} parent=15 // pred_fallthru
        _
      // Predicated region
      $region49: #{loss_backbone_hbonds.1} parent=15 // pred_check
        %p524 = pneg %p277
      $region50: #{loss_backbone_hbonds.1} parent=15 // pred_check_branch
        %526 = sbr.rel (%p524) target = $region52
      $region51: #{loss_backbone_hbonds.1} parent=15 // pred_region
        %p527 = scmp.lt.s32.totalorder %s26, 1
        %s528 = scalar_select %p527, %s26, 1
        %p529 = scmp.lt.s32.totalorder %s27, 0
        %s530 = scalar_select %p529, %s27, 0
        %s531 = smul.addr %s528, 6
        %s532 = sadd.s32 %s530, %s531
        %s533 = smul.addr %s532, 4
        %s534 = scalar_lea.vmem %s8, %s533
      $region52: #{loss_backbone_hbonds.1} parent=15 // pred_fallthru
        _
      // Predicated region
      $region53: #{loss_backbone_hbonds.1} parent=15 // pred_check
        %p535 = pneg %p305
      $region54: #{loss_backbone_hbonds.1} parent=15 // pred_check_branch
        %537 = sbr.rel (%p535) target = $region56
      $region55: #{loss_backbone_hbonds.1} parent=15 // pred_region
        %p538 = scmp.lt.s32.totalorder %s26, 1
        %s539 = scalar_select %p538, %s26, 1
        %p540 = scmp.lt.s32.totalorder %s27, 0
        %s541 = scalar_select %p540, %s27, 0
        %s542 = smul.addr %s539, 6
        %s543 = sadd.s32 %s541, %s542
        %s544 = smul.addr %s543, 4
        %s545 = scalar_lea.vmem %s9, %s544
      $region56: #{loss_backbone_hbonds.1} parent=15 // pred_fallthru
        _
      // Predicated region
      $region57: #{loss_backbone_hbonds.1} parent=15 // pred_check
        %p546 = pneg %p333
      $region58: #{loss_backbone_hbonds.1} parent=15 // pred_check_branch
        %548 = sbr.rel (%p546) target = $region60
      $region59: #{loss_backbone_hbonds.1} parent=15 // pred_region
        %p549 = scmp.lt.s32.totalorder %s26, 1
        %s550 = scalar_select %p549, %s26, 1
        %p551 = scmp.lt.s32.totalorder %s27, 0
        %s552 = scalar_select %p551, %s27, 0
        %s553 = smul.addr %s550, 2
        %s554 = sadd.s32 %s552, %s553
        %s555 = smul.addr %s554, 4
        %s556 = scalar_lea.vmem %s10, %s555
      $region60: #{loss_backbone_hbonds.1} parent=15 // pred_fallthru
        _
      // Predicated region
      $region61: #{loss_backbone_hbonds.1} parent=15 // pred_check
        %p557 = pneg %p361
      $region62: #{loss_backbone_hbonds.1} parent=15 // pred_check_branch
        %559 = sbr.rel (%p557) target = $region64
      $region63: #{loss_backbone_hbonds.1} parent=15 // pred_region
        %p560 = scmp.lt.s32.totalorder %s26, 1
        %s561 = scalar_select %p560, %s26, 1
        %p562 = scmp.lt.s32.totalorder %s27, 0
        %s563 = scalar_select %p562, %s27, 0
        %s564 = smul.addr %s561, 2
        %s565 = sadd.s32 %s563, %s564
        %s566 = smul.addr %s565, 8
        %s567 = scalar_lea.vmem %s11, %s566
      $region64: #{loss_backbone_hbonds.1} parent=15 // pred_fallthru
        _
      // Predicated region
      $region65: #{loss_backbone_hbonds.1} parent=15 // pred_check
        %p568 = pneg %p389
      $region66: #{loss_backbone_hbonds.1} parent=15 // pred_check_branch
        %570 = sbr.rel (%p568) target = $region68
      $region67: #{loss_backbone_hbonds.1} parent=15 // pred_region
        %p571 = scmp.lt.s32.totalorder %s26, 1
        %s572 = scalar_select %p571, %s26, 1
        %p573 = scmp.lt.s32.totalorder %s27, 0
        %s574 = scalar_select %p573, %s27, 0
        %s575 = smul.addr %s572, 2
        %s576 = sadd.s32 %s574, %s575
        %s577 = smul.addr %s576, 4
        %s578 = scalar_lea.vmem %s12, %s577
      $region68: #{loss_backbone_hbonds.1} parent=15 // pred_fallthru
        _
    $region16: #{loss_backbone_hbonds.1} parent=5 // pred_fallthru
      _
    %p579 = scmp.le.s32.totalorder 1, %s19
    %p580 = scmp.lt.s32.totalorder %s19, 3
    %p581 = pnand %p579, %p580
    %p582 = pneg %p581
    // Predicated region
    $region69: #{loss_backbone_hbonds.1} parent=5 // pred_check
      _
    $region70: #{loss_backbone_hbonds.1} parent=5 // pred_check_branch
      %584 = sbr.rel (%p581) target = $region72
    $region71: #{loss_backbone_hbonds.1} parent=5 // pred_region
      %s585 = ssub.s32 %s19, 1
      %p586 = scmp.lt.s32.totalorder %s28, 1
      %s587 = scalar_select %p586, %s28, 1
      %p588 = scmp.lt.s32.totalorder %s29, 0
      %s589 = scalar_select %p588, %s29, 0
      %s590 = sadd.s32 %s589, %s587
      %s591 = smul.addr %s590, 4
      %s592 = scalar_lea.vmem %s0, %s591
      %p593 = pneg %p59
      %p594 = pneg %p56
      %p595 = scmp.lt.s32.totalorder %s28, 1
      %s596 = scalar_select %p595, %s28, 1
      %p597 = scmp.lt.s32.totalorder %s29, 0
      %s598 = scalar_select %p597, %s29, 0
      %s599 = sadd.s32 %s598, %s596
      %s600 = smul.addr %s599, 4
      %s601 = scalar_lea.vmem %s1, %s600
      %p602 = pneg %p87
      %p603 = pneg %p84
      %p604 = scmp.lt.s32.totalorder %s28, 1
      %s605 = scalar_select %p604, %s28, 1
      %p606 = scmp.lt.s32.totalorder %s29, 0
      %s607 = scalar_select %p606, %s29, 0
      %s608 = sadd.s32 %s607, %s605
      %s609 = smul.addr %s608, 4
      %s610 = scalar_lea.vmem %s2, %s609
      %p611 = pneg %p115
      %p612 = pneg %p112
      %p613 = scmp.lt.s32.totalorder %s28, 1
      %s614 = scalar_select %p613, %s28, 1
      %p615 = scmp.lt.s32.totalorder %s29, 0
      %s616 = scalar_select %p615, %s29, 0
      %s617 = smul.addr %s614, 6
      %s618 = sadd.s32 %s616, %s617
      %s619 = smul.addr %s618, 4
      %s620 = scalar_lea.vmem %s3, %s619
      %p621 = pneg %p143
      %p622 = pneg %p140
      %p623 = scmp.lt.s32.totalorder %s28, 1
      %s624 = scalar_select %p623, %s28, 1
      %p625 = scmp.lt.s32.totalorder %s29, 0
      %s626 = scalar_select %p625, %s29, 0
      %s627 = smul.addr %s624, 6
      %s628 = sadd.s32 %s626, %s627
      %s629 = smul.addr %s628, 4
      %s630 = scalar_lea.vmem %s4, %s629
      %p631 = pneg %p171
      %p632 = pneg %p168
      %p633 = scmp.lt.s32.totalorder %s28, 1
      %s634 = scalar_select %p633, %s28, 1
      %p635 = scmp.lt.s32.totalorder %s29, 0
      %s636 = scalar_select %p635, %s29, 0
      %s637 = sadd.s32 %s636, %s634
      %s638 = smul.addr %s637, 4
      %s639 = scalar_lea.vmem %s5, %s638
      %p640 = pneg %p199
      %p641 = pneg %p196
      %p642 = scmp.lt.s32.totalorder %s28, 1
      %s643 = scalar_select %p642, %s28, 1
      %p644 = scmp.lt.s32.totalorder %s29, 0
      %s645 = scalar_select %p644, %s29, 0
      %s646 = sadd.s32 %s645, %s643
      %s647 = smul.addr %s646, 4
      %s648 = scalar_lea.vmem %s6, %s647
      %p649 = pneg %p227
      %p650 = pneg %p224
      %p651 = scmp.lt.s32.totalorder %s28, 1
      %s652 = scalar_select %p651, %s28, 1
      %p653 = scmp.lt.s32.totalorder %s29, 0
      %s654 = scalar_select %p653, %s29, 0
      %s655 = sadd.s32 %s654, %s652
      %s656 = smul.addr %s655, 4
      %s657 = scalar_lea.vmem %s7, %s656
      %p658 = pneg %p255
      %p659 = pneg %p252
      %p660 = scmp.lt.s32.totalorder %s28, 1
      %s661 = scalar_select %p660, %s28, 1
      %p662 = scmp.lt.s32.totalorder %s29, 0
      %s663 = scalar_select %p662, %s29, 0
      %s664 = smul.addr %s661, 6
      %s665 = sadd.s32 %s663, %s664
      %s666 = smul.addr %s665, 4
      %s667 = scalar_lea.vmem %s8, %s666
      %p668 = pneg %p283
      %p669 = pneg %p280
      %p670 = scmp.lt.s32.totalorder %s28, 1
      %s671 = scalar_select %p670, %s28, 1
      %p672 = scmp.lt.s32.totalorder %s29, 0
      %s673 = scalar_select %p672, %s29, 0
      %s674 = smul.addr %s671, 6
      %s675 = sadd.s32 %s673, %s674
      %s676 = smul.addr %s675, 4
      %s677 = scalar_lea.vmem %s9, %s676
      %p678 = pneg %p311
      %p679 = pneg %p308
      %p680 = scmp.lt.s32.totalorder %s28, 1
      %s681 = scalar_select %p680, %s28, 1
      %p682 = scmp.lt.s32.totalorder %s29, 0
      %s683 = scalar_select %p682, %s29, 0
      %s684 = smul.addr %s681, 2
      %s685 = sadd.s32 %s683, %s684
      %s686 = smul.addr %s685, 4
      %s687 = scalar_lea.vmem %s10, %s686
      %p688 = pneg %p339
      %p689 = pneg %p336
      %p690 = scmp.lt.s32.totalorder %s28, 1
      %s691 = scalar_select %p690, %s28, 1
      %p692 = scmp.lt.s32.totalorder %s29, 0
      %s693 = scalar_select %p692, %s29, 0
      %s694 = smul.addr %s691, 2
      %s695 = sadd.s32 %s693, %s694
      %s696 = smul.addr %s695, 8
      %s697 = scalar_lea.vmem %s11, %s696
      %p698 = pneg %p367
      %p699 = pneg %p364
      %p700 = scmp.lt.s32.totalorder %s28, 1
      %s701 = scalar_select %p700, %s28, 1
      %p702 = scmp.lt.s32.totalorder %s29, 0
      %s703 = scalar_select %p702, %s29, 0
      %s704 = smul.addr %s701, 2
      %s705 = sadd.s32 %s703, %s704
      %s706 = smul.addr %s705, 4
      %s707 = scalar_lea.vmem %s12, %s706
      %p708 = pneg %p395
      %p709 = pneg %p392
      %p710 = pneg %p423
      %p711 = pneg %p420
      %p712 = scmp.lt.s32.totalorder %s28, 1
      %s713 = scalar_select %p712, %s28, 1
      %p714 = scmp.lt.s32.totalorder %s29, 0
      %s715 = scalar_select %p714, %s29, 0
      %s716 = sadd.s32 %s715, %s713
      %s717 = smul.addr %s716, 8
      %s718 = scalar_lea.vmem %s13, %s717
      %p719 = scmp.lt.s32.totalorder %s28, 1
      %s720 = scalar_select %p719, %s28, 1
      %p721 = scmp.lt.s32.totalorder %s29, 0
      %s722 = scalar_select %p721, %s29, 0
      %s723 = sadd.s32 %s722, %s720
      %s724 = smul.addr %s723, 4
      %s725 = scalar_lea.vmem %s0, %s724
      %p726 = scmp.lt.s32.totalorder %s28, 1
      %s727 = scalar_select %p726, %s28, 1
      %p728 = scmp.lt.s32.totalorder %s29, 0
      %s729 = scalar_select %p728, %s29, 0
      %s730 = sadd.s32 %s729, %s727
      %s731 = smul.addr %s730, 4
      %s732 = scalar_lea.vmem %s1, %s731
      %p733 = scmp.lt.s32.totalorder %s28, 1
      %s734 = scalar_select %p733, %s28, 1
      %p735 = scmp.lt.s32.totalorder %s29, 0
      %s736 = scalar_select %p735, %s29, 0
      %s737 = sadd.s32 %s736, %s734
      %s738 = smul.addr %s737, 4
      %s739 = scalar_lea.vmem %s2, %s738
      %p740 = scmp.lt.s32.totalorder %s28, 1
      %s741 = scalar_select %p740, %s28, 1
      %p742 = scmp.lt.s32.totalorder %s29, 0
      %s743 = scalar_select %p742, %s29, 0
      %s744 = smul.addr %s741, 6
      %s745 = sadd.s32 %s743, %s744
      %s746 = smul.addr %s745, 4
      %s747 = scalar_lea.vmem %s3, %s746
      %p748 = scmp.lt.s32.totalorder %s28, 1
      %s749 = scalar_select %p748, %s28, 1
      %p750 = scmp.lt.s32.totalorder %s29, 0
      %s751 = scalar_select %p750, %s29, 0
      %s752 = smul.addr %s749, 6
      %s753 = sadd.s32 %s751, %s752
      %s754 = smul.addr %s753, 4
      %s755 = scalar_lea.vmem %s4, %s754
      %p756 = scmp.lt.s32.totalorder %s28, 1
      %s757 = scalar_select %p756, %s28, 1
      %p758 = scmp.lt.s32.totalorder %s29, 0
      %s759 = scalar_select %p758, %s29, 0
      %s760 = sadd.s32 %s759, %s757
      %s761 = smul.addr %s760, 4
      %s762 = scalar_lea.vmem %s5, %s761
      %p763 = scmp.lt.s32.totalorder %s28, 1
      %s764 = scalar_select %p763, %s28, 1
      %p765 = scmp.lt.s32.totalorder %s29, 0
      %s766 = scalar_select %p765, %s29, 0
      %s767 = sadd.s32 %s766, %s764
      %s768 = smul.addr %s767, 4
      %s769 = scalar_lea.vmem %s6, %s768
      %p770 = scmp.lt.s32.totalorder %s28, 1
      %s771 = scalar_select %p770, %s28, 1
      %p772 = scmp.lt.s32.totalorder %s29, 0
      %s773 = scalar_select %p772, %s29, 0
      %s774 = sadd.s32 %s773, %s771
      %s775 = smul.addr %s774, 4
      %s776 = scalar_lea.vmem %s7, %s775
      %p777 = scmp.lt.s32.totalorder %s28, 1
      %s778 = scalar_select %p777, %s28, 1
      %p779 = scmp.lt.s32.totalorder %s29, 0
      %s780 = scalar_select %p779, %s29, 0
      %s781 = smul.addr %s778, 6
      %s782 = sadd.s32 %s780, %s781
      %s783 = smul.addr %s782, 4
      %s784 = scalar_lea.vmem %s8, %s783
      %p785 = scmp.lt.s32.totalorder %s28, 1
      %s786 = scalar_select %p785, %s28, 1
      %p787 = scmp.lt.s32.totalorder %s29, 0
      %s788 = scalar_select %p787, %s29, 0
      %s789 = smul.addr %s786, 6
      %s790 = sadd.s32 %s788, %s789
      %s791 = smul.addr %s790, 4
      %s792 = scalar_lea.vmem %s9, %s791
      %p793 = scmp.lt.s32.totalorder %s28, 1
      %s794 = scalar_select %p793, %s28, 1
      %p795 = scmp.lt.s32.totalorder %s29, 0
      %s796 = scalar_select %p795, %s29, 0
      %s797 = smul.addr %s794, 2
      %s798 = sadd.s32 %s796, %s797
      %s799 = smul.addr %s798, 4
      %s800 = scalar_lea.vmem %s10, %s799
      %p801 = scmp.lt.s32.totalorder %s28, 1
      %s802 = scalar_select %p801, %s28, 1
      %p803 = scmp.lt.s32.totalorder %s29, 0
      %s804 = scalar_select %p803, %s29, 0
      %s805 = smul.addr %s802, 2
      %s806 = sadd.s32 %s804, %s805
      %s807 = smul.addr %s806, 8
      %s808 = scalar_lea.vmem %s11, %s807
      %p809 = scmp.lt.s32.totalorder %s28, 1
      %s810 = scalar_select %p809, %s28, 1
      %p811 = scmp.lt.s32.totalorder %s29, 0
      %s812 = scalar_select %p811, %s29, 0
      %s813 = smul.addr %s810, 2
      %s814 = sadd.s32 %s812, %s813
      %s815 = smul.addr %s814, 4
      %s816 = scalar_lea.vmem %s12, %s815
      %p817 = scmp.lt.s32.totalorder %s28, 1
      %s818 = scalar_select %p817, %s28, 1
      %p819 = scmp.lt.s32.totalorder %s29, 0
      %s820 = scalar_select %p819, %s29, 0
      %s821 = sadd.s32 %s820, %s818
      %s822 = smul.addr %s821, 8
      %s823 = scalar_lea.vmem %s13, %s822
      %v824 = vld [vmem:[%s800] sm:$0xf]
      %v825 = vld [vmem:[%s800 + $0x4] sm:$0xf]
      %v826 = vunpack.c.l.bf16 %v824
      %v827 = vunpack.c.l.bf16 %v825
      %v828 = vld [vmem:[%s816] sm:$0xf]
      %v829 = vld [vmem:[%s816 + $0x4] sm:$0xf]
      %v830 = vunpack.c.l.bf16 %v828
      %v831 = vunpack.c.l.bf16 %v829
      %v832 = vld [vmem:[%s808] sm:$0xff]
      %v833 = vld [vmem:[%s808 + $0x8] sm:$0xff]
      %v834 = vld [vmem:[%s725] sm:$0x7]
      %v835 = vld [vmem:[%s732] sm:$0x7]
      %v836 = vld [vmem:[%s739] sm:$0x7]
      %v837 = vld [vmem:[%s747] sm:$0xf]
      %v838 = vld [vmem:[%s747 + $0x4] sm:$0xf]
      %v839 = vld [vmem:[%s747 + $0x8] sm:$0xf]
      %v840 = vld [vmem:[%s747 + $0xc] sm:$0xf]
      %v841 = vld [vmem:[%s747 + $0x10] sm:$0xf]
      %v842 = vld [vmem:[%s747 + $0x14] sm:$0xf]
      %v843 = vld [vmem:[%s755] sm:$0xf]
      %v844 = vld [vmem:[%s755 + $0x4] sm:$0xf]
      %v845 = vld [vmem:[%s755 + $0x8] sm:$0xf]
      %v846 = vld [vmem:[%s755 + $0xc] sm:$0xf]
      %v847 = vld [vmem:[%s755 + $0x10] sm:$0xf]
      %v848 = vld [vmem:[%s755 + $0x14] sm:$0xf]
      %v849 = vsub.f32 %v834, %v836
      %v850 = vmul.f32 %v849, %v849
      %vm851 = vcmask 1042432
      %v852 = vsel %vm851, %v850, 0.0
      %v853 = vrot.slane %v852, 4
      %v854 = vadd.f32 %v852, %v853
      %v855 = vrot.slane %v854, 2
      %v856 = vadd.f32 %v854, %v855
      %v857 = vrot.slane %v856, 1
      %v858 = vadd.f32 %v856, %v857
      %v859 = vadd.f32 %v858, 0.001
      %v860 = vrsqrt.pop %v859
      %v861 = vmul.f32 %v849, %v860
      %v862 = vsub.f32 %v834, %v835
      %v863 = vmul.f32 %v862, %v862
      %v864 = vsel %vm851, %v863, 0.0
      %v865 = vrot.slane %v864, 4
      %v866 = vadd.f32 %v864, %v865
      %v867 = vrot.slane %v866, 2
      %v868 = vadd.f32 %v866, %v867
      %v869 = vrot.slane %v868, 1
      %v870 = vadd.f32 %v868, %v869
      %v871 = vadd.f32 %v870, 0.001
      %v872 = vrsqrt.pop %v871
      %v873 = vmul.f32 %v862, %v872
      %v874 = vadd.f32 %v861, %v873
      %v875 = vmul.f32 %v874, %v874
      %v876 = vsel %vm851, %v875, 0.0
      %v877 = vrot.slane %v876, 4
      %v878 = vadd.f32 %v876, %v877
      %v879 = vrot.slane %v878, 2
      %v880 = vadd.f32 %v878, %v879
      %v881 = vrot.slane %v880, 1
      %v882 = vadd.f32 %v880, %v881
      %v883 = vadd.f32 %v882, 0.001
      %v884 = vrsqrt.pop %v883
      %v885 = vmul.f32 %v874, %v884
      %v886 = vmul.f32 %v885, 1.015
      %v889 = vunpack.c.l.s4 1966171168
      %v890 = vunpack.c.0.s8 %v889
      %v891 = vlaneseq
      %v892 = vshrl.u32 %v891, 7
      %v893 = vsub.s32 %v890, %v892
      %v894 = vrot.slane %v886, %v893
      %v895 = vcombine.high %v894, %v894
      %v897 = vunpack.c.l.s4 1966171168
      %v898 = vunpack.c.0.s8 %v897
      %v899 = vlaneseq
      %v900 = vshrl.u32 %v899, 7
      %v901 = vsub.s32 %v898, %v900
      %v902 = vrot.slane %v894, %v901
      %v904 = vunpack.c.l.s4 1966171168
      %v905 = vunpack.c.0.s8 %v904
      %v906 = vlaneseq
      %v907 = vshrl.u32 %v906, 7
      %v908 = vsub.s32 %v905, %v907
      %v909 = vrot.slane %v895, %v908
      %v910 = vcombine.high %v902, %v902
      %v911 = vunpack.c.l.bf16 %v837
      %v912 = vunpack.c.l.bf16 %v838
      %v913 = vunpack.c.l.bf16 %v839
      %v914 = vunpack.c.l.bf16 %v840
      %v915 = vunpack.c.l.bf16 %v841
      %v916 = vunpack.c.l.bf16 %v842
      %v917 = vunpack.c.l.bf16 %v843
      %v918 = vunpack.c.l.bf16 %v844
      %v919 = vunpack.c.l.bf16 %v845
      %v920 = vunpack.c.l.bf16 %v846
      %v921 = vunpack.c.l.bf16 %v847
      %v922 = vunpack.c.l.bf16 %v848
      %v923 = vmul.f32 %v911, %v911
      %v924 = vmul.f32 %v912, %v912
      %v925 = vmul.f32 %v913, %v913
      %v926 = vmul.f32 %v914, %v914
      %v927 = vmul.f32 %v915, %v915
      %v928 = vmul.f32 %v916, %v916
      %v929 = vadd.f32 %v923, %v925
      %v930 = vadd.f32 %v929, %v927
      %v931 = vadd.f32 %v924, %v926
      %v932 = vadd.f32 %v931, %v928
      %v933 = vadd.f32 %v930, 0.001
      %v934 = vadd.f32 %v932, 0.001
      %v935 = vrsqrt.pop %v933
      %v936 = vrsqrt.pop %v934
      %v937 = vmul.f32 %v917, %v917
      %v938 = vmul.f32 %v918, %v918
      %v939 = vmul.f32 %v919, %v919
      %v940 = vmul.f32 %v920, %v920
      %v941 = vmul.f32 %v921, %v921
      %v942 = vmul.f32 %v922, %v922
      %v943 = vadd.f32 %v937, %v939
      %v944 = vadd.f32 %v943, %v941
      %v945 = vadd.f32 %v938, %v940
      %v946 = vadd.f32 %v945, %v942
      %v947 = vadd.f32 %v944, 0.001
      %v948 = vadd.f32 %v946, 0.001
      %v949 = vrsqrt.pop %v947
      %v950 = vrsqrt.pop %v948
      %v951 = vsub.f32 %v935, %v949
      %v952 = vsub.f32 %v936, %v950
      %v953 = vlaneseq
      %v954 = vshrl.u32 %v953, 7
      %v955 = vsub.s32 0, %v954
      %v956 = vrot.slane %v902, %v955
      %v957 = vlaneseq
      %v958 = vshrl.u32 %v957, 7
      %v959 = vsub.s32 0, %v958
      %v960 = vrot.slane %v909, %v959
      %v961 = vlaneseq
      %v962 = vshrl.u32 %v961, 7
      %v963 = vsub.s32 0, %v962
      %v964 = vrot.slane %v910, %v963
      %v968 = vsub.f32 %v917, %v956
      %v969 = vsub.f32 %v918, %v956
      %v970 = vsub.f32 %v919, %v960
      %v971 = vsub.f32 %v920, %v960
      %v972 = vsub.f32 %v921, %v964
      %v973 = vsub.f32 %v922, %v964
      %v974 = vmul.f32 %v968, %v968
      %v975 = vmul.f32 %v969, %v969
      %v976 = vmul.f32 %v970, %v970
      %v977 = vmul.f32 %v971, %v971
      %v978 = vmul.f32 %v972, %v972
      %v979 = vmul.f32 %v973, %v973
      %v980 = vadd.f32 %v974, %v976
      %v981 = vadd.f32 %v980, %v978
      %v982 = vadd.f32 %v975, %v977
      %v983 = vadd.f32 %v982, %v979
      %v984 = vadd.f32 %v981, 0.001
      %v985 = vadd.f32 %v983, 0.001
      %v986 = vrsqrt.pop %v984
      %v987 = vrsqrt.pop %v985
      %v988 = vadd.f32 %v951, %v986
      %v989 = vadd.f32 %v952, %v987
      %v990 = vsub.f32 %v911, %v956
      %v991 = vsub.f32 %v912, %v956
      %v992 = vsub.f32 %v913, %v960
      %v993 = vsub.f32 %v914, %v960
      %v994 = vsub.f32 %v915, %v964
      %v995 = vsub.f32 %v916, %v964
      %v996 = vmul.f32 %v990, %v990
      %v997 = vmul.f32 %v991, %v991
      %v998 = vmul.f32 %v992, %v992
      %v999 = vmul.f32 %v993, %v993
      %v1000 = vmul.f32 %v994, %v994
      %v1001 = vmul.f32 %v995, %v995
      %v1002 = vadd.f32 %v996, %v998
      %v1003 = vadd.f32 %v1002, %v1000
      %v1004 = vadd.f32 %v997, %v999
      %v1005 = vadd.f32 %v1004, %v1001
      %v1006 = vadd.f32 %v1003, 0.001
      %v1007 = vadd.f32 %v1005, 0.001
      %v1008 = vrsqrt.pop %v1006
      %v1009 = vrsqrt.pop %v1007
      %v1010 = vsub.f32 %v988, %v1008
      %v1011 = vsub.f32 %v989, %v1009
      %v1012 = vmul.f32 %v1010, 27.888
      %v1013 = vmul.f32 %v1011, 27.888
      %vm1014 = vcmp.lt.f32.partialorder %v933, 12.96
      %vm1015 = vcmp.lt.f32.partialorder %v934, 12.96
      %vm1016 = vcmp.lt.f32.partialorder %v1012, -0.5
      %vm1017 = vcmp.lt.f32.partialorder %v1013, -0.5
      %vm1018 = vmand %vm1014, %vm1016
      %vm1019 = vmand %vm1015, %vm1017
      %v1020 = vsel %vm1018, %v826, 0.0
      %v1021 = vsel %vm1019, %v827, 0.0
      %v1022 = vld [vmem:[%s762] sm:$0x7]
      %v1023 = vld [vmem:[%s769] sm:$0x7]
      %v1024 = vld [vmem:[%s776] sm:$0x7]
      %v1025 = vld [vmem:[%s784] sm:$0xf]
      %v1026 = vld [vmem:[%s784 + $0x4] sm:$0xf]
      %v1027 = vld [vmem:[%s784 + $0x8] sm:$0xf]
      %v1028 = vld [vmem:[%s784 + $0xc] sm:$0xf]
      %v1029 = vld [vmem:[%s784 + $0x10] sm:$0xf]
      %v1030 = vld [vmem:[%s784 + $0x14] sm:$0xf]
      %v1031 = vld [vmem:[%s792] sm:$0xf]
      %v1032 = vld [vmem:[%s792 + $0x4] sm:$0xf]
      %v1033 = vld [vmem:[%s792 + $0x8] sm:$0xf]
      %v1034 = vld [vmem:[%s792 + $0xc] sm:$0xf]
      %v1035 = vld [vmem:[%s792 + $0x10] sm:$0xf]
      %v1036 = vld [vmem:[%s792 + $0x14] sm:$0xf]
      %v1037 = vsub.f32 %v1022, %v1024
      %v1038 = vmul.f32 %v1037, %v1037
      %v1039 = vsel %vm851, %v1038, 0.0
      %v1040 = vrot.slane %v1039, 4
      %v1041 = vadd.f32 %v1039, %v1040
      %v1042 = vrot.slane %v1041, 2
      %v1043 = vadd.f32 %v1041, %v1042
      %v1044 = vrot.slane %v1043, 1
      %v1045 = vadd.f32 %v1043, %v1044
      %v1046 = vadd.f32 %v1045, 0.001
      %v1047 = vrsqrt.pop %v1046
      %v1048 = vmul.f32 %v1037, %v1047
      %v1049 = vsub.f32 %v1022, %v1023
      %v1050 = vmul.f32 %v1049, %v1049
      %v1051 = vsel %vm851, %v1050, 0.0
      %v1052 = vrot.slane %v1051, 4
      %v1053 = vadd.f32 %v1051, %v1052
      %v1054 = vrot.slane %v1053, 2
      %v1055 = vadd.f32 %v1053, %v1054
      %v1056 = vrot.slane %v1055, 1
      %v1057 = vadd.f32 %v1055, %v1056
      %v1058 = vadd.f32 %v1057, 0.001
      %v1059 = vrsqrt.pop %v1058
      %v1060 = vmul.f32 %v1049, %v1059
      %v1061 = vadd.f32 %v1048, %v1060
      %v1062 = vmul.f32 %v1061, %v1061
      %v1063 = vsel %vm851, %v1062, 0.0
      %v1064 = vrot.slane %v1063, 4
      %v1065 = vadd.f32 %v1063, %v1064
      %v1066 = vrot.slane %v1065, 2
      %v1067 = vadd.f32 %v1065, %v1066
      %v1068 = vrot.slane %v1067, 1
      %v1069 = vadd.f32 %v1067, %v1068
      %v1070 = vadd.f32 %v1069, 0.001
      %v1071 = vrsqrt.pop %v1070
      %v1072 = vmul.f32 %v1061, %v1071
      %v1073 = vmul.f32 %v1072, 1.015
      %v1076 = vunpack.c.l.s4 1966171168
      %v1077 = vunpack.c.0.s8 %v1076
      %v1078 = vlaneseq
      %v1079 = vshrl.u32 %v1078, 7
      %v1080 = vsub.s32 %v1077, %v1079
      %v1081 = vrot.slane %v1073, %v1080
      %v1082 = vcombine.high %v1081, %v1081
      %v1084 = vunpack.c.l.s4 1966171168
      %v1085 = vunpack.c.0.s8 %v1084
      %v1086 = vlaneseq
      %v1087 = vshrl.u32 %v1086, 7
      %v1088 = vsub.s32 %v1085, %v1087
      %v1089 = vrot.slane %v1081, %v1088
      %v1091 = vunpack.c.l.s4 1966171168
      %v1092 = vunpack.c.0.s8 %v1091
      %v1093 = vlaneseq
      %v1094 = vshrl.u32 %v1093, 7
      %v1095 = vsub.s32 %v1092, %v1094
      %v1096 = vrot.slane %v1082, %v1095
      %v1097 = vcombine.high %v1089, %v1089
      %v1098 = vunpack.c.l.bf16 %v1025
      %v1099 = vunpack.c.l.bf16 %v1026
      %v1100 = vunpack.c.l.bf16 %v1027
      %v1101 = vunpack.c.l.bf16 %v1028
      %v1102 = vunpack.c.l.bf16 %v1029
      %v1103 = vunpack.c.l.bf16 %v1030
      %v1104 = vunpack.c.l.bf16 %v1031
      %v1105 = vunpack.c.l.bf16 %v1032
      %v1106 = vunpack.c.l.bf16 %v1033
      %v1107 = vunpack.c.l.bf16 %v1034
      %v1108 = vunpack.c.l.bf16 %v1035
      %v1109 = vunpack.c.l.bf16 %v1036
      %v1110 = vmul.f32 %v1098, %v1098
      %v1111 = vmul.f32 %v1099, %v1099
      %v1112 = vmul.f32 %v1100, %v1100
      %v1113 = vmul.f32 %v1101, %v1101
      %v1114 = vmul.f32 %v1102, %v1102
      %v1115 = vmul.f32 %v1103, %v1103
      %v1116 = vadd.f32 %v1110, %v1112
      %v1117 = vadd.f32 %v1116, %v1114
      %v1118 = vadd.f32 %v1111, %v1113
      %v1119 = vadd.f32 %v1118, %v1115
      %v1120 = vadd.f32 %v1117, 0.001
      %v1121 = vadd.f32 %v1119, 0.001
      %v1122 = vrsqrt.pop %v1120
      %v1123 = vrsqrt.pop %v1121
      %v1124 = vmul.f32 %v1104, %v1104
      %v1125 = vmul.f32 %v1105, %v1105
      %v1126 = vmul.f32 %v1106, %v1106
      %v1127 = vmul.f32 %v1107, %v1107
      %v1128 = vmul.f32 %v1108, %v1108
      %v1129 = vmul.f32 %v1109, %v1109
      %v1130 = vadd.f32 %v1124, %v1126
      %v1131 = vadd.f32 %v1130, %v1128
      %v1132 = vadd.f32 %v1125, %v1127
      %v1133 = vadd.f32 %v1132, %v1129
      %v1134 = vadd.f32 %v1131, 0.001
      %v1135 = vadd.f32 %v1133, 0.001
      %v1136 = vrsqrt.pop %v1134
      %v1137 = vrsqrt.pop %v1135
      %v1138 = vsub.f32 %v1122, %v1136
      %v1139 = vsub.f32 %v1123, %v1137
      %v1140 = vlaneseq
      %v1141 = vshrl.u32 %v1140, 7
      %v1142 = vsub.s32 0, %v1141
      %v1143 = vrot.slane %v1089, %v1142
      %v1144 = vlaneseq
      %v1145 = vshrl.u32 %v1144, 7
      %v1146 = vsub.s32 0, %v1145
      %v1147 = vrot.slane %v1096, %v1146
      %v1148 = vlaneseq
      %v1149 = vshrl.u32 %v1148, 7
      %v1150 = vsub.s32 0, %v1149
      %v1151 = vrot.slane %v1097, %v1150
      %v1155 = vsub.f32 %v1104, %v1143
      %v1156 = vsub.f32 %v1105, %v1143
      %v1157 = vsub.f32 %v1106, %v1147
      %v1158 = vsub.f32 %v1107, %v1147
      %v1159 = vsub.f32 %v1108, %v1151
      %v1160 = vsub.f32 %v1109, %v1151
      %v1161 = vmul.f32 %v1155, %v1155
      %v1162 = vmul.f32 %v1156, %v1156
      %v1163 = vmul.f32 %v1157, %v1157
      %v1164 = vmul.f32 %v1158, %v1158
      %v1165 = vmul.f32 %v1159, %v1159
      %v1166 = vmul.f32 %v1160, %v1160
      %v1167 = vadd.f32 %v1161, %v1163
      %v1168 = vadd.f32 %v1167, %v1165
      %v1169 = vadd.f32 %v1162, %v1164
      %v1170 = vadd.f32 %v1169, %v1166
      %v1171 = vadd.f32 %v1168, 0.001
      %v1172 = vadd.f32 %v1170, 0.001
      %v1173 = vrsqrt.pop %v1171
      %v1174 = vrsqrt.pop %v1172
      %v1175 = vadd.f32 %v1138, %v1173
      %v1176 = vadd.f32 %v1139, %v1174
      %v1177 = vsub.f32 %v1098, %v1143
      %v1178 = vsub.f32 %v1099, %v1143
      %v1179 = vsub.f32 %v1100, %v1147
      %v1180 = vsub.f32 %v1101, %v1147
      %v1181 = vsub.f32 %v1102, %v1151
      %v1182 = vsub.f32 %v1103, %v1151
      %v1183 = vmul.f32 %v1177, %v1177
      %v1184 = vmul.f32 %v1178, %v1178
      %v1185 = vmul.f32 %v1179, %v1179
      %v1186 = vmul.f32 %v1180, %v1180
      %v1187 = vmul.f32 %v1181, %v1181
      %v1188 = vmul.f32 %v1182, %v1182
      %v1189 = vadd.f32 %v1183, %v1185
      %v1190 = vadd.f32 %v1189, %v1187
      %v1191 = vadd.f32 %v1184, %v1186
      %v1192 = vadd.f32 %v1191, %v1188
      %v1193 = vadd.f32 %v1190, 0.001
      %v1194 = vadd.f32 %v1192, 0.001
      %v1195 = vrsqrt.pop %v1193
      %v1196 = vrsqrt.pop %v1194
      %v1197 = vsub.f32 %v1175, %v1195
      %v1198 = vsub.f32 %v1176, %v1196
      %v1199 = vmul.f32 %v1197, 27.888
      %v1200 = vmul.f32 %v1198, 27.888
      %vm1201 = vcmp.lt.f32.partialorder %v1120, 12.96
      %vm1202 = vcmp.lt.f32.partialorder %v1121, 12.96
      %vm1203 = vcmp.lt.f32.partialorder %v1199, -0.5
      %vm1204 = vcmp.lt.f32.partialorder %v1200, -0.5
      %vm1205 = vmand %vm1201, %vm1203
      %vm1206 = vmand %vm1202, %vm1204
      %v1207 = vsel %vm1205, %v826, 0.0
      %v1208 = vsel %vm1206, %v827, 0.0
      %vm1209 = vcmp.lt.f32.partialorder %v832, 8.0
      %vm1210 = vcmp.lt.f32.partialorder %v833, 8.0
      %v1211 = vsel %vm1209, %v830, 0.0
      %v1212 = vsel %vm1210, %v831, 0.0
      %v1213 = vmul.f32 %v1020, %v1207
      %v1214 = vmul.f32 %v1021, %v1208
      %v1215 = vmul.f32 %v830, %v1207
      %v1216 = vmul.f32 %v831, %v1208
      %v1217 = vmul.f32 %v830, %v1020
      %v1218 = vmul.f32 %v831, %v1021
      %v1219 = vadd.f32 %v1213, %v1214
      %1220 = vadd.xlane.f32.xlu0 %v1219
      %v1221 = vpop.xlane.xlu0 %1220
      %v1222 = vrot.slane %v1221, 4
      %v1223 = vadd.f32 %v1221, %v1222
      %v1224 = vrot.slane %v1223, 2
      %v1225 = vadd.f32 %v1223, %v1224
      %v1226 = vrot.slane %v1225, 1
      %v1227 = vadd.f32 %v1225, %v1226
      %v1228 = vadd.f32 %v1207, %v1208
      %1229 = vadd.xlane.f32.xlu0 %v1228
      %v1230 = vpop.xlane.xlu0 %1229
      %v1231 = vrot.slane %v1230, 4
      %v1232 = vadd.f32 %v1230, %v1231
      %v1233 = vrot.slane %v1232, 2
      %v1234 = vadd.f32 %v1232, %v1233
      %v1235 = vrot.slane %v1234, 1
      %v1236 = vadd.f32 %v1234, %v1235
      %v1237 = vmul.f32 %v1211, %v1213
      %v1238 = vmul.f32 %v1212, %v1214
      %v1239 = vadd.f32 %v1237, %v1238
      %1240 = vadd.xlane.f32.xlu0 %v1239
      %v1241 = vpop.xlane.xlu0 %1240
      %v1242 = vrot.slane %v1241, 4
      %v1243 = vadd.f32 %v1241, %v1242
      %v1244 = vrot.slane %v1243, 2
      %v1245 = vadd.f32 %v1243, %v1244
      %v1246 = vrot.slane %v1245, 1
      %v1247 = vadd.f32 %v1245, %v1246
      %v1248 = vmul.f32 %v1211, %v1207
      %v1249 = vmul.f32 %v1212, %v1208
      %v1250 = vadd.f32 %v1248, %v1249
      %1251 = vadd.xlane.f32.xlu0 %v1250
      %v1252 = vpop.xlane.xlu0 %1251
      %v1253 = vrot.slane %v1252, 4
      %v1254 = vadd.f32 %v1252, %v1253
      %v1255 = vrot.slane %v1254, 2
      %v1256 = vadd.f32 %v1254, %v1255
      %v1257 = vrot.slane %v1256, 1
      %v1258 = vadd.f32 %v1256, %v1257
      %v1259 = vmul.f32 %v1215, %v832
      %v1260 = vmul.f32 %v1216, %v833
      %v1261 = vadd.f32 %v1259, %v1260
      %1262 = vadd.xlane.f32.xlu0 %v1261
      %v1263 = vpop.xlane.xlu0 %1262
      %v1264 = vrot.slane %v1263, 4
      %v1265 = vadd.f32 %v1263, %v1264
      %v1266 = vrot.slane %v1265, 2
      %v1267 = vadd.f32 %v1265, %v1266
      %v1268 = vrot.slane %v1267, 1
      %v1269 = vadd.f32 %v1267, %v1268
      %v1270 = vadd.f32 %v1215, %v1216
      %1271 = vadd.xlane.f32.xlu0 %v1270
      %v1272 = vpop.xlane.xlu0 %1271
      %v1273 = vrot.slane %v1272, 4
      %v1274 = vadd.f32 %v1272, %v1273
      %v1275 = vrot.slane %v1274, 2
      %v1276 = vadd.f32 %v1274, %v1275
      %v1277 = vrot.slane %v1276, 1
      %v1278 = vadd.f32 %v1276, %v1277
      %v1279 = vmul.f32 %v1217, %v832
      %v1280 = vmul.f32 %v1218, %v833
      %v1281 = vadd.f32 %v1279, %v1280
      %1282 = vadd.xlane.f32.xlu0 %v1281
      %v1283 = vpop.xlane.xlu0 %1282
      %v1284 = vrot.slane %v1283, 4
      %v1285 = vadd.f32 %v1283, %v1284
      %v1286 = vrot.slane %v1285, 2
      %v1287 = vadd.f32 %v1285, %v1286
      %v1288 = vrot.slane %v1287, 1
      %v1289 = vadd.f32 %v1287, %v1288
      %v1290 = vadd.f32 %v1217, %v1218
      %1291 = vadd.xlane.f32.xlu0 %v1290
      %v1292 = vpop.xlane.xlu0 %1291
      %v1293 = vrot.slane %v1292, 4
      %v1294 = vadd.f32 %v1292, %v1293
      %v1295 = vrot.slane %v1294, 2
      %v1296 = vadd.f32 %v1294, %v1295
      %v1297 = vrot.slane %v1296, 1
      %v1298 = vadd.f32 %v1296, %v1297
      %v1299 = vlaneseq
      %v1300 = vand.u32 %v1299, 127
      %vm1301 = vcmp.eq.s32.totalorder %v1300, 0
      %v1302 = vsel %vm1301, %v1227, 0.0
      %vm1303 = vcmp.eq.s32.totalorder %v1300, 1
      %v1304 = vsel %vm1303, %v1236, %v1302
      %vm1305 = vcmp.eq.s32.totalorder %v1300, 2
      %v1306 = vsel %vm1305, %v1247, %v1304
      %vm1307 = vcmp.eq.s32.totalorder %v1300, 3
      %v1308 = vsel %vm1307, %v1258, %v1306
      %vm1309 = vcmp.eq.s32.totalorder %v1300, 4
      %v1310 = vsel %vm1309, %v1269, %v1308
      %vm1311 = vcmp.eq.s32.totalorder %v1300, 5
      %v1312 = vsel %vm1311, %v1278, %v1310
      %vm1313 = vcmp.eq.s32.totalorder %v1300, 6
      %v1314 = vsel %vm1313, %v1289, %v1312
      %vm1315 = vcmp.eq.s32.totalorder %v1300, 7
      %v1316 = vsel %vm1315, %v1298, %v1314
      %1317 = vst [vmem:[%s823] sm:$0xff] %v1316
      %p1318 = scmp.lt.s32.totalorder %s28, 1
      %s1319 = scalar_select %p1318, %s28, 1
      %p1320 = scmp.lt.s32.totalorder %s29, 0
      %s1321 = scalar_select %p1320, %s29, 0
      %s1322 = sadd.s32 %s1321, %s1319
      %s1323 = smul.addr %s1322, 8
      %s1324 = scalar_lea.vmem %s13, %s1323
      // Predicated region
      $region73: #{loss_backbone_hbonds.1} parent=71 // pred_check
        %p1325 = pneg %p420
      $region74: #{loss_backbone_hbonds.1} parent=71 // pred_check_branch
        %1327 = sbr.rel (%p1325) target = $region76
      $region75: #{loss_backbone_hbonds.1} parent=71 // pred_region
        _
      $region76: #{loss_backbone_hbonds.1} parent=71 // pred_fallthru
        _
    $region72: #{loss_backbone_hbonds.1} parent=5 // pred_fallthru
      _
    %p1328 = scmp.le.s32.totalorder 2, %s19
    // Predicated region
    $region77: #{loss_backbone_hbonds.1} parent=5 // pred_check
      %p1329 = pneg %p1328
    $region78: #{loss_backbone_hbonds.1} parent=5 // pred_check_branch
      %1331 = sbr.rel (%p1329) target = $region80
    $region79: #{loss_backbone_hbonds.1} parent=5 // pred_region
      %s1332 = ssub.s32 %s19, 2
      // Predicated region
      $region81: #{loss_backbone_hbonds.1} parent=79 // pred_check
        %p1333 = pneg %p426
      $region82: #{loss_backbone_hbonds.1} parent=79 // pred_check_branch
        %1335 = sbr.rel (%p1333) target = $region84
      $region83: #{loss_backbone_hbonds.1} parent=79 // pred_region
        %p1336 = scmp.lt.s32.totalorder %s30, 1
        %s1337 = scalar_select %p1336, %s30, 1
        %p1338 = scmp.lt.s32.totalorder %s31, 0
        %s1339 = scalar_select %p1338, %s31, 0
        %s1340 = sadd.s32 %s1339, %s1337
        %s1341 = smul.addr %s1340, 8
        %s1342 = scalar_lea.vmem %s13, %s1341
      $region84: #{loss_backbone_hbonds.1} parent=79 // pred_fallthru
        _
    $region80: #{loss_backbone_hbonds.1} parent=5 // pred_fallthru
      _
  $region6: #{loss_backbone_hbonds.1} parent=0 // loop_footer
    %s23 = sadd.s32 1, %s19
  $region7: #{loss_backbone_hbonds.1} parent=0 // loop_footer_branch
    %18 = sbr.rel target = $region3
  $region8: #{loss_backbone_hbonds.1} parent=0 // loop_exit
    _

</llo_original>
